<compile_context>
chip_gen: v7x
topology: tpu7x:2x2x1
jax: 0.10.0
libtpu: 0.0.40
codegen_flags: <defaults>
</compile_context>

<pallas_src>
import functools
from typing import NamedTuple, Tuple

import jax
import jax.numpy as jnp
from jax.experimental import pallas as pl
from jax.experimental.pallas import tpu as pltpu

LANE = 128  # TPU lane width; feature dims are zero-padded to a multiple of this.


def _round_up(n, m):
    return ((n + m - 1) // m) * m


def _jacobi_k_constants(order, alpha, beta):
    """Recurrence constants k1, k2, k3 (match CustomJacobiLayer.set_k)."""
    k1 = [0.0] * (order + 1)
    k2 = [0.0] * (order + 1)
    k3 = [0.0] * (order + 1)
    a, b = float(alpha), float(beta)
    for i in range(2, order + 1):
        k1[i] = (2 * i + a + b) * (2 * i + a + b - 1) / (2 * i * (i + a + b))
        k2[i] = (2 * i + a + b - 1) * (a * a - b * b) / (
            2 * i * (i + a + b) * (2 * i + a + b - 2))
        k3[i] = (i + a - 1) * (i + b - 1) * (2 * i + a + b) / (
            i * (i + a + b) * (2 * i + a + b - 2))
    return tuple(k1), tuple(k2), tuple(k3)


class _LayerMeta(NamedTuple):
    in_size: int
    out_size: int
    i_pad: int
    o_pad: int
    k_packed: int            # K dim of the packed weight
    dense: bool              # densely lane-packed (K == 128) vs per-basis 128-aligned
    order: int
    alpha: float
    beta: float
    k1: Tuple[float, ...]
    k2: Tuple[float, ...]
    k3: Tuple[float, ...]


def _basis_terms(t, meta):
    """Yields (d, P_d(t)) one at a time; only two f32 terms stay live."""
    p_prev = jnp.ones_like(t)
    yield 0, p_prev
    if meta.order < 1:
        return
    p_cur = 0.5 * (meta.alpha + meta.beta + 2.0) * t - 0.5 * (meta.alpha - meta.beta)
    yield 1, p_cur
    for i in range(2, meta.order + 1):
        p_next = (meta.k1[i] * t + meta.k2[i]) * p_cur - meta.k3[i] * p_prev
        p_prev, p_cur = p_cur, p_next
        yield i, p_cur


def _layer_forward(h, w_ref, jcat_ref, meta, mm_dtype):
    """One JacobiKAN layer: (tile_b, i_pad) f32 -> (tile_b, o_pad) f32."""
    t = jnp.tanh(h)  # EUP; padded feature lanes hold tanh(0) = 0.
    if meta.dense:
        # Narrow layer: all (order+1) basis blocks are packed densely into one
        # 128-lane slab so K (and the weight DMA / MXU passes) is 128 instead
        # of (order+1)*128.  Lane moves ride the XLU (pltpu.roll); the select
        # is cheap VPU work.  Lanes >= (order+1)*in_size stay 0 and the packed
        # weight has zero rows there.
        lane = jax.lax.broadcasted_iota(jnp.int32, t.shape, 1)
        jcat = jnp.zeros(t.shape, jnp.float32)
        for d, p in _basis_terms(t, meta):
            off = d * meta.in_size
            rolled = pltpu.roll(p, shift=off, axis=1) if off else p
            jcat = jnp.where((lane >= off) & (lane < off + meta.in_size),
                             rolled, jcat)
        lhs = jcat.astype(mm_dtype)
    else:
        # Wide layer: stream each basis term straight into its 128-aligned
        # lane slice of the bf16 VMEM slab as soon as it is produced (no f32
        # concat copy, no (order+1) live f32 arrays -> no vreg spills).
        for d, p in _basis_terms(t, meta):
            jcat_ref[:, pl.ds(d * meta.i_pad, meta.i_pad)] = p.astype(mm_dtype)
        lhs = jcat_ref[:, pl.ds(0, meta.k_packed)]
    return jnp.dot(lhs, w_ref[...], preferred_element_type=jnp.float32)


def _fused_kan_kernel(*refs, metas, mm_dtype, use_slab):
    """All layers fused; activation stays resident in VMEM/vregs."""
    n = len(metas)
    x_ref = refs[0]
    w_refs = refs[1:1 + n]
    o_ref = refs[1 + n]
    jcat_ref = refs[2 + n] if use_slab else None
    h = x_ref[...].astype(jnp.float32)
    for w_ref, meta in zip(w_refs, metas):
        h = _layer_forward(h, w_ref, jcat_ref, meta, mm_dtype)
    o_ref[...] = h.astype(o_ref.dtype)


def _layer_kan_kernel(x_ref, w_ref, o_ref, *scratch, meta, mm_dtype, use_slab):
    """Single layer with an N-tiled (streamed) weight.

    The tanh + basis is recomputed once per weight N-tile; in this regime the
    kernel is weight-DMA bound, so the extra VPU/EUP work hides under the DMA.
    TODO(synk): stage jcat once per batch tile to skip the recompute.
    """
    jcat_ref = scratch[0] if use_slab else None
    h = x_ref[...].astype(jnp.float32)
    o_ref[...] = _layer_forward(h, w_ref, jcat_ref, meta, mm_dtype).astype(o_ref.dtype)


def _const_weight_spec(shape, single_buffer):
    """Full-array weight block with a constant index_map (stays resident).

    With a constant index_map a second pipeline buffer is pure waste, so
    request single buffering when the jax version supports it.
    """
    if single_buffer:
        try:
            return pl.BlockSpec(shape, lambda *_: (0, 0),
                                pipeline_mode=pl.Buffered(1))
        except (TypeError, AttributeError):
            pass
    return pl.BlockSpec(shape, lambda *_: (0, 0))


def _vmem_capacity_bytes():
    try:
        info = pltpu.get_tpu_info()
        cap = int(getattr(info, "vmem_capacity_bytes", 0))
        if cap > 0:
            return cap
    except Exception:
        pass
    return 64 << 20  # conservative (v7x-sized) fallback if the query fails


class JacobiKAN:
    """JAX/Pallas port of the PyTorch JacobiKAN (deterministic random init)."""

    def __init__(self, layer_sizes, order=5, alpha=0.5, beta=0.5, key=None,
                 mm_dtype=jnp.bfloat16):
        assert len(layer_sizes) >= 2
        self.layer_sizes = list(layer_sizes)
        self.order = int(order)
        self.alpha = float(alpha)
        self.beta = float(beta)
        self.mm_dtype = mm_dtype
        if key is None:
            key = jax.random.PRNGKey(0)

        d = self.order + 1
        k1, k2, k3 = _jacobi_k_constants(self.order, self.alpha, self.beta)

        self.coefs = []      # original f32 (O, I, D) params (reference / export)
        self._packed = []    # packed (K, O_pad) mm_dtype weights for the kernels
        self._metas = []

        for li in range(1, len(layer_sizes)):
            key, sub = jax.random.split(key)
            in_size, out_size = layer_sizes[li - 1], layer_sizes[li]
            # matches nn.Parameter(torch.randn(out, in, order+1) * 0.1)
            coef = 0.1 * jax.random.normal(sub, (out_size, in_size, d), jnp.float32)
            self.coefs.append(coef)

            i_pad = _round_up(in_size, LANE)
            o_pad = _round_up(out_size, LANE)
            dense = d * in_size <= LANE
            # PADDING INVARIANT: activation feature lanes >= in_size are zero,
            # so tanh there is 0 but the Jacobi basis is NOT (P0 = 1, P_d(0)!=0
            # in general).  Correctness relies on the packed weight having
            # exactly-zero rows for every K position that does not correspond
            # to a real (basis d, input i) pair.  Keep that invariant if the
            # packing below is changed.
            if dense:
                # K = 128: row d*in_size + i holds coef[:, i, d]; rest zero.
                k_packed = LANE
                w = jnp.transpose(coef, (2, 1, 0)).reshape(d * in_size, out_size)
                w = jnp.pad(w, ((0, k_packed - d * in_size), (0, o_pad - out_size)))
            else:
                # K = (order+1) * i_pad: 128-aligned per-basis blocks.
                # TODO(synk): layers with in_size < 128 but (order+1)*in_size > 128
                # could also be packed densely (needs unaligned lane slices).
                k_packed = d * i_pad
                w = jnp.pad(coef,
                            ((0, o_pad - out_size), (0, i_pad - in_size), (0, 0)))
                w = jnp.transpose(w, (2, 1, 0)).reshape(k_packed, o_pad)
            self._packed.append(w.astype(mm_dtype))
            self._metas.append(_LayerMeta(in_size, out_size, i_pad, o_pad,
                                          k_packed, dense, self.order,
                                          self.alpha, self.beta, k1, k2, k3))
        self._metas = tuple(self._metas)

    # ------------------------------------------------------------------ sizing

    def _fused_working_bytes(self, tile_b, single_buffer):
        metas = self._metas
        mm_bytes = jnp.dtype(self.mm_dtype).itemsize
        w_bytes = sum(w.size * w.dtype.itemsize for w in self._packed)
        if not single_buffer:
            w_bytes *= 2
        slab_k = max((m.k_packed for m in metas if not m.dense), default=0)
        max_w = max(max(m.i_pad for m in metas), metas[-1].o_pad)
        act = 2 * tile_b * (metas[0].i_pad + metas[-1].o_pad) * 4  # in/out tiles x2 bufs
        slab = tile_b * slab_k * mm_bytes                          # bf16 jcat scratch
        live = 8 * tile_b * max_w * 4                              # live f32 values + slack
        return w_bytes + act + slab + live

    # ----------------------------------------------------------------- forward

    def __call__(self, x, *, force_stream=False):
        batch, in_size = x.shape
        assert in_size == self.layer_sizes[0]
        metas = self._metas
        i0_pad = metas[0].i_pad
        out_size = metas[-1].out_size

        cap = _vmem_capacity_bytes()
        vmem_limit = int(0.8 * cap)   # generation-aware (~102 MiB v5e/v6e, ~51 MiB v7x)
        budget = int(0.7 * cap)

        # Batch tile: single tile for small batches; 256/512 rows for large
        # batches (fills the 256-wide MXUs and amortizes the ~0.35us/step grid
        # overhead), subject to VMEM and keeping grid >= 2 for megacore.
        b8 = _round_up(max(batch, 1), 8)
        if b8 <= 128:
            tile_b = b8
        else:
            cands = (512, 256, 128) if cap >= (96 << 20) else (256, 128)
            tile_b = 128
            for c in cands:
                if 2 * c <= b8 and self._fused_working_bytes(c, True) <= budget:
                    tile_b = c
                    break

        # Feature-dim zero pad only (required by the padding invariant above);
        # the batch dim uses a cdiv grid: a ragged last block stays row-local
        # and its out-of-bounds stores are masked by Pallas.
        xp = x.astype(jnp.float32)
        if in_size != i0_pad:
            xp = jnp.pad(xp, ((0, 0), (0, i0_pad - in_size)))

        fits_single = self._fused_working_bytes(tile_b, True) <= budget
        fits_double = self._fused_working_bytes(tile_b, False) <= budget

        if force_stream or not fits_single:
            out = self._stream_forward(xp, batch, tile_b, vmem_limit, budget)
        else:
            try:
                out = self._fused_call(xp, batch, tile_b, vmem_limit, True)
            except Exception:
                # Only demotes the single-buffer (pl.Buffered(1)) hint; the
                # retried paths are the previously-validated configurations.
                if fits_double:
                    out = self._fused_call(xp, batch, tile_b, vmem_limit, False)
                else:
                    out = self._stream_forward(xp, batch, tile_b, vmem_limit, budget)

        return out[:batch, :out_size]

    # ------------------------------------------------- fused (resident weights)

    def _fused_call(self, xp, batch, tile_b, vmem_limit, single_buffer):
        metas = self._metas
        i0_pad = metas[0].i_pad
        o_last_pad = metas[-1].o_pad
        slab_k = max((m.k_packed for m in metas if not m.dense), default=0)
        use_slab = slab_k > 0
        grid = (pl.cdiv(batch, tile_b),)

        in_specs = [pl.BlockSpec((tile_b, i0_pad), lambda b: (b, 0))]
        for w in self._packed:
            in_specs.append(_const_weight_spec(w.shape, single_buffer))
        out_specs = pl.BlockSpec((tile_b, o_last_pad), lambda b: (b, 0))
        scratch = [pltpu.VMEM((tile_b, slab_k), self.mm_dtype)] if use_slab else []

        kernel = functools.partial(_fused_kan_kernel, metas=metas,
                                   mm_dtype=self.mm_dtype, use_slab=use_slab)

        flops = sum(2 * batch * w.shape[0] * w.shape[1] for w in self._packed)
        transc = sum(batch * m.i_pad for m in metas)
        bytes_acc = (xp.size * 4 + batch * o_last_pad * 4
                     + sum(w.size * w.dtype.itemsize for w in self._packed))

        return pl.pallas_call(
            kernel,
            out_shape=jax.ShapeDtypeStruct((batch, o_last_pad), jnp.float32),
            grid_spec=pltpu.PrefetchScalarGridSpec(
                num_scalar_prefetch=0,
                grid=grid,
                in_specs=in_specs,
                out_specs=out_specs,
                scratch_shapes=scratch,
            ),
            compiler_params=pltpu.CompilerParams(
                dimension_semantics=("parallel",),
                vmem_limit_bytes=vmem_limit,
            ),
            cost_estimate=pl.CostEstimate(
                flops=int(flops), transcendentals=int(transc),
                bytes_accessed=int(bytes_acc)),
        )(xp, *self._packed)

    # ---------------------------------------------- per-layer weight streaming

    def _stream_forward(self, xp, batch, tile_b, vmem_limit, budget):
        """Weights too large for residency (hits first on v7x's 64 MiB VMEM):
        one pallas_call per layer, streaming N-tiles of the packed weight."""
        h = xp
        for li in range(len(self._metas)):
            h = self._layer_call(h, li, batch, tile_b, vmem_limit, budget)
        return h

    def _layer_call(self, h, li, batch, tile_b, vmem_limit, budget):
        meta = self._metas[li]
        w = self._packed[li]
        k_packed, o_pad = w.shape
        i_pad = meta.i_pad
        use_slab = not meta.dense
        mm_bytes = jnp.dtype(self.mm_dtype).itemsize

        # Widest weight N-tile that fits: bigger tiles -> fewer activation
        # re-reads and a fuller MXU N dimension.
        # TODO(synk): for enormous K (very wide layers) also tile K with an
        # accumulator + "arbitrary" grid axis.
        tn = 128
        for c in (512, 256):
            if o_pad % c == 0:
                need = (2 * k_packed * c * mm_bytes          # streamed weight tile x2 bufs
                        + 2 * tile_b * (i_pad + c) * 4        # h / out tiles x2 bufs
                        + tile_b * k_packed * mm_bytes        # jcat slab
                        + 8 * tile_b * i_pad * 4)             # live f32 values
                if need <= budget:
                    tn = c
                    break

        nn = o_pad // tn
        # Weight-N outer axis: the weight tile's block index is constant over
        # the inner batch loop, so each weight tile is DMAed exactly once.
        grid = (nn, pl.cdiv(batch, tile_b))

        in_specs = [
            pl.BlockSpec((tile_b, i_pad), lambda n, b: (b, 0)),
            pl.BlockSpec((k_packed, tn), lambda n, b: (0, n)),
        ]
        out_specs = pl.BlockSpec((tile_b, tn), lambda n, b: (b, n))
        scratch = [pltpu.VMEM((tile_b, k_packed), self.mm_dtype)] if use_slab else []

        kernel = functools.partial(_layer_kan_kernel, meta=meta,
                                   mm_dtype=self.mm_dtype, use_slab=use_slab)

        flops = 2 * batch * k_packed * o_pad
        bytes_acc = (nn * h.size * h.dtype.itemsize
                     + w.size * w.dtype.itemsize + batch * o_pad * 4)

        return pl.pallas_call(
            kernel,
            out_shape=jax.ShapeDtypeStruct((batch, o_pad), jnp.float32),
            grid_spec=pltpu.PrefetchScalarGridSpec(
                num_scalar_prefetch=0,
                grid=grid,
                in_specs=in_specs,
                out_specs=out_specs,
                scratch_shapes=scratch,
            ),
            compiler_params=pltpu.CompilerParams(
                dimension_semantics=("parallel", "parallel"),
                vmem_limit_bytes=vmem_limit,
            ),
            cost_estimate=pl.CostEstimate(
                flops=int(flops), transcendentals=int(nn * batch * i_pad),
                bytes_accessed=int(bytes_acc)),
        )(h, w)


def _reference_forward(x, coefs, order, alpha, beta, mm_dtype=jnp.float32):
    """Pure-JAX reference mirroring the PyTorch forward, for validation.

    mm_dtype controls the contraction-operand dtype (f32 = exact PyTorch
    semantics; bf16 = mirrors the kernel's MXU operand precision).
    """
    k1, k2, k3 = _jacobi_k_constants(order, alpha, beta)
    x = x.astype(jnp.float32)
    for coef in coefs:
        t = jnp.tanh(x)
        js = [jnp.ones_like(t)]
        if order >= 1:
            js.append(0.5 * (alpha + beta + 2.0) * t - 0.5 * (alpha - beta))
        for i in range(2, order + 1):
            js.append((k1[i] * t + k2[i]) * js[-1] - k3[i] * js[-2])
        J = jnp.stack(js, axis=2)                                  # (B, I, D)
        x = jnp.einsum('bid,oid->bo', J.astype(mm_dtype), coef.astype(mm_dtype),
                       preferred_element_type=jnp.float32)         # (B, O)
    return x


if __name__ == "__main__":
    layer_sizes = [4, 32, 8]
    order, alpha, beta = 5, 0.5, 0.5
    batch = 8

    key = jax.random.PRNGKey(0)
    key_x, key_p = jax.random.split(key)
    x = jax.random.normal(key_x, (batch, layer_sizes[0]), dtype=jnp.float32)

    model = JacobiKAN(layer_sizes, order=order, alpha=alpha, beta=beta, key=key_p)

    out = jax.block_until_ready(model(x))
    assert out.shape == (batch, layer_sizes[-1])

    # 1) Mechanics check: reference using the same bf16 matmul operands
    #    (tight tolerance; differences are only f32 accumulation order).
    ref_bf16 = _reference_forward(x, model.coefs, order, alpha, beta,
                                  mm_dtype=jnp.bfloat16)
    assert jnp.allclose(out, ref_bf16, atol=1e-2, rtol=1e-2), (
        float(jnp.max(jnp.abs(out - ref_bf16))))

    # 2) Full-precision semantics check (loose tolerance: the kernel feeds
    #    bf16 operands to the MXU while accumulating in f32).
    ref_f32 = _reference_forward(x, model.coefs, order, alpha, beta,
                                 mm_dtype=jnp.float32)
    assert jnp.allclose(out, ref_f32, atol=1.5e-1, rtol=1e-1), (
        float(jnp.max(jnp.abs(out - ref_f32))))

    # 3) Exercise the weight-streaming fallback (the path taken automatically
    #    when packed weights exceed the VMEM budget, e.g. on v7x).
    out_stream = jax.block_until_ready(model(x, force_stream=True))
    assert out_stream.shape == (batch, layer_sizes[-1])
    assert jnp.allclose(out_stream, ref_bf16, atol=1e-2, rtol=1e-2), (
        float(jnp.max(jnp.abs(out_stream - ref_bf16))))

    print("KERNEL_OK")
</pallas_src>

<mosaic_0001>
module attributes {stable_mosaic.version = 11 : i64} {
  func.func @_fused_kan_kernel(%arg0: i32, %arg1: memref<8x128xf32, #tpu.memory_space<vmem>>, %arg2: memref<128x128xbf16, #tpu.memory_space<vmem>>, %arg3: memref<768x128xbf16, #tpu.memory_space<vmem>>, %arg4: memref<8x128xf32, #tpu.memory_space<vmem>>, %arg5: memref<8x768xbf16, #tpu.memory_space<vmem>>) attributes {dimension_semantics = [#tpu.dimension_semantics<parallel>], iteration_bounds = array<i64: 1>, scalar_prefetch = 0 : i64, scratch_operands = 1 : i64, tpu.core_type = #tpu.core_type<tc>, window_params = [{transform_indices = @transform_0, window_bounds = array<i64: 8, 128>}, {pipeline_mode = #tpu.pipeline_mode<synchronous>, transform_indices = @transform_1, window_bounds = array<i64: 128, 128>}, {pipeline_mode = #tpu.pipeline_mode<synchronous>, transform_indices = @transform_2, window_bounds = array<i64: 768, 128>}, {transform_indices = @transform_3, window_bounds = array<i64: 8, 128>}]} {
    %c0 = arith.constant 0 : index
    %c0_0 = arith.constant 0 : index
    %0 = vector.load %arg1[%c0, %c0_0] : memref<8x128xf32, #tpu.memory_space<vmem>>, vector<8x128xf32>
    %1 = math.tanh %0 : vector<8x128xf32>
    %2 = tpu.iota {dimensions = array<i32: 1>} : vector<8x128xi32>
    %cst = arith.constant 0.000000e+00 : f32
    %3 = vector.broadcast %cst : f32 to vector<8x128xf32>
    %cst_1 = arith.constant 1.000000e+00 : f32
    %4 = vector.broadcast %cst_1 : f32 to vector<8x128xf32>
    %c0_i32 = arith.constant 0 : i32
    %5 = vector.broadcast %c0_i32 : i32 to vector<8x128xi32>
    %6 = arith.cmpi sge, %2, %5 : vector<8x128xi32>
    %c4_i32 = arith.constant 4 : i32
    %7 = vector.broadcast %c4_i32 : i32 to vector<8x128xi32>
    %8 = arith.cmpi slt, %2, %7 : vector<8x128xi32>
    %9 = arith.andi %6, %8 : vector<8x128xi1>
    %10 = arith.select %9, %4, %3 : vector<8x128xi1>, vector<8x128xf32>
    %cst_2 = arith.constant 1.500000e+00 : f32
    %11 = vector.broadcast %cst_2 : f32 to vector<8x128xf32>
    %12 = arith.mulf %11, %1 : vector<8x128xf32>
    %cst_3 = arith.constant 0.000000e+00 : f32
    %13 = vector.broadcast %cst_3 : f32 to vector<8x128xf32>
    %14 = arith.subf %12, %13 : vector<8x128xf32>
    %c4_i32_4 = arith.constant 4 : i32
    %15 = tpu.dynamic_rotate %14 by %c4_i32_4 dim 1 : vector<8x128xf32>, i32 -> vector<8x128xf32>
    %c4_i32_5 = arith.constant 4 : i32
    %16 = vector.broadcast %c4_i32_5 : i32 to vector<8x128xi32>
    %17 = arith.cmpi sge, %2, %16 : vector<8x128xi32>
    %c8_i32 = arith.constant 8 : i32
    %18 = vector.broadcast %c8_i32 : i32 to vector<8x128xi32>
    %19 = arith.cmpi slt, %2, %18 : vector<8x128xi32>
    %20 = arith.andi %17, %19 : vector<8x128xi1>
    %21 = arith.select %20, %15, %10 : vector<8x128xi1>, vector<8x128xf32>
    %cst_6 = arith.constant 1.66666663 : f32
    %22 = vector.broadcast %cst_6 : f32 to vector<8x128xf32>
    %23 = arith.mulf %22, %1 : vector<8x128xf32>
    %cst_7 = arith.constant 0.000000e+00 : f32
    %24 = vector.broadcast %cst_7 : f32 to vector<8x128xf32>
    %25 = arith.addf %23, %24 : vector<8x128xf32>
    %26 = arith.mulf %25, %14 : vector<8x128xf32>
    %cst_8 = arith.constant 6.250000e-01 : f32
    %27 = vector.broadcast %cst_8 : f32 to vector<8x128xf32>
    %28 = arith.mulf %27, %4 : vector<8x128xf32>
    %29 = arith.subf %26, %28 : vector<8x128xf32>
    %c8_i32_9 = arith.constant 8 : i32
    %30 = tpu.dynamic_rotate %29 by %c8_i32_9 dim 1 : vector<8x128xf32>, i32 -> vector<8x128xf32>
    %c8_i32_10 = arith.constant 8 : i32
    %31 = vector.broadcast %c8_i32_10 : i32 to vector<8x128xi32>
    %32 = arith.cmpi sge, %2, %31 : vector<8x128xi32>
    %c12_i32 = arith.constant 12 : i32
    %33 = vector.broadcast %c12_i32 : i32 to vector<8x128xi32>
    %34 = arith.cmpi slt, %2, %33 : vector<8x128xi32>
    %35 = arith.andi %32, %34 : vector<8x128xi1>
    %36 = arith.select %35, %30, %21 : vector<8x128xi1>, vector<8x128xf32>
    %cst_11 = arith.constant 1.750000e+00 : f32
    %37 = vector.broadcast %cst_11 : f32 to vector<8x128xf32>
    %38 = arith.mulf %37, %1 : vector<8x128xf32>
    %cst_12 = arith.constant 0.000000e+00 : f32
    %39 = vector.broadcast %cst_12 : f32 to vector<8x128xf32>
    %40 = arith.addf %38, %39 : vector<8x128xf32>
    %41 = arith.mulf %40, %29 : vector<8x128xf32>
    %cst_13 = arith.constant 0.729166686 : f32
    %42 = vector.broadcast %cst_13 : f32 to vector<8x128xf32>
    %43 = arith.mulf %42, %14 : vector<8x128xf32>
    %44 = arith.subf %41, %43 : vector<8x128xf32>
    %c12_i32_14 = arith.constant 12 : i32
    %45 = tpu.dynamic_rotate %44 by %c12_i32_14 dim 1 : vector<8x128xf32>, i32 -> vector<8x128xf32>
    %c12_i32_15 = arith.constant 12 : i32
    %46 = vector.broadcast %c12_i32_15 : i32 to vector<8x128xi32>
    %47 = arith.cmpi sge, %2, %46 : vector<8x128xi32>
    %c16_i32 = arith.constant 16 : i32
    %48 = vector.broadcast %c16_i32 : i32 to vector<8x128xi32>
    %49 = arith.cmpi slt, %2, %48 : vector<8x128xi32>
    %50 = arith.andi %47, %49 : vector<8x128xi1>
    %51 = arith.select %50, %45, %36 : vector<8x128xi1>, vector<8x128xf32>
    %cst_16 = arith.constant 1.800000e+00 : f32
    %52 = vector.broadcast %cst_16 : f32 to vector<8x128xf32>
    %53 = arith.mulf %52, %1 : vector<8x128xf32>
    %cst_17 = arith.constant 0.000000e+00 : f32
    %54 = vector.broadcast %cst_17 : f32 to vector<8x128xf32>
    %55 = arith.addf %53, %54 : vector<8x128xf32>
    %56 = arith.mulf %55, %44 : vector<8x128xf32>
    %cst_18 = arith.constant 7.875000e-01 : f32
    %57 = vector.broadcast %cst_18 : f32 to vector<8x128xf32>
    %58 = arith.mulf %57, %29 : vector<8x128xf32>
    %59 = arith.subf %56, %58 : vector<8x128xf32>
    %c16_i32_19 = arith.constant 16 : i32
    %60 = tpu.dynamic_rotate %59 by %c16_i32_19 dim 1 : vector<8x128xf32>, i32 -> vector<8x128xf32>
    %c16_i32_20 = arith.constant 16 : i32
    %61 = vector.broadcast %c16_i32_20 : i32 to vector<8x128xi32>
    %62 = arith.cmpi sge, %2, %61 : vector<8x128xi32>
    %c20_i32 = arith.constant 20 : i32
    %63 = vector.broadcast %c20_i32 : i32 to vector<8x128xi32>
    %64 = arith.cmpi slt, %2, %63 : vector<8x128xi32>
    %65 = arith.andi %62, %64 : vector<8x128xi1>
    %66 = arith.select %65, %60, %51 : vector<8x128xi1>, vector<8x128xf32>
    %cst_21 = arith.constant 1.83333337 : f32
    %67 = vector.broadcast %cst_21 : f32 to vector<8x128xf32>
    %68 = arith.mulf %67, %1 : vector<8x128xf32>
    %cst_22 = arith.constant 0.000000e+00 : f32
    %69 = vector.broadcast %cst_22 : f32 to vector<8x128xf32>
    %70 = arith.addf %68, %69 : vector<8x128xf32>
    %71 = arith.mulf %70, %59 : vector<8x128xf32>
    %cst_23 = arith.constant 0.824999988 : f32
    %72 = vector.broadcast %cst_23 : f32 to vector<8x128xf32>
    %73 = arith.mulf %72, %44 : vector<8x128xf32>
    %74 = arith.subf %71, %73 : vector<8x128xf32>
    %c20_i32_24 = arith.constant 20 : i32
    %75 = tpu.dynamic_rotate %74 by %c20_i32_24 dim 1 : vector<8x128xf32>, i32 -> vector<8x128xf32>
    %c20_i32_25 = arith.constant 20 : i32
    %76 = vector.broadcast %c20_i32_25 : i32 to vector<8x128xi32>
    %77 = arith.cmpi sge, %2, %76 : vector<8x128xi32>
    %c24_i32 = arith.constant 24 : i32
    %78 = vector.broadcast %c24_i32 : i32 to vector<8x128xi32>
    %79 = arith.cmpi slt, %2, %78 : vector<8x128xi32>
    %80 = arith.andi %77, %79 : vector<8x128xi1>
    %81 = arith.select %80, %75, %66 : vector<8x128xi1>, vector<8x128xf32>
    %82 = arith.truncf %81 : vector<8x128xf32> to vector<8x128xbf16>
    %c0_26 = arith.constant 0 : index
    %c0_27 = arith.constant 0 : index
    %83 = vector.load %arg2[%c0_26, %c0_27] : memref<128x128xbf16, #tpu.memory_space<vmem>>, vector<128x128xbf16>
    %cst_28 = arith.constant dense<0.000000e+00> : vector<8x128xf32>
    %84 = tpu.matmul %82, %83, %cst_28 {dimension_numbers = #tpu.dot_dimension_numbers<[1], [0], [0], [1], [0, 0, 1, 1], [], []>} : vector<8x128xbf16>, vector<128x128xbf16>, vector<8x128xf32> -> vector<8x128xf32>
    %85 = math.tanh %84 : vector<8x128xf32>
    %cst_29 = arith.constant 1.000000e+00 : f32
    %86 = vector.broadcast %cst_29 : f32 to vector<8x128xf32>
    %87 = arith.truncf %86 : vector<8x128xf32> to vector<8x128xbf16>
    %c0_30 = arith.constant 0 : index
    %c0_31 = arith.constant 0 : index
    %88 = vector.load %arg5[%c0_30, %c0_31] : memref<8x768xbf16, #tpu.memory_space<vmem>>, vector<8x128xbf16>
    tpu.vector_store %arg5[%c0_30, %c0_31], %87 {strides = array<i32>} : memref<8x768xbf16, #tpu.memory_space<vmem>>, vector<8x128xbf16>,
    %cst_32 = arith.constant 1.500000e+00 : f32
    %89 = vector.broadcast %cst_32 : f32 to vector<8x128xf32>
    %90 = arith.mulf %89, %85 : vector<8x128xf32>
    %cst_33 = arith.constant 0.000000e+00 : f32
    %91 = vector.broadcast %cst_33 : f32 to vector<8x128xf32>
    %92 = arith.subf %90, %91 : vector<8x128xf32>
    %93 = arith.truncf %92 : vector<8x128xf32> to vector<8x128xbf16>
    %c0_34 = arith.constant 0 : index
    %c128 = arith.constant 128 : index
    %94 = vector.load %arg5[%c0_34, %c128] : memref<8x768xbf16, #tpu.memory_space<vmem>>, vector<8x128xbf16>
    tpu.vector_store %arg5[%c0_34, %c128], %93 {strides = array<i32>} : memref<8x768xbf16, #tpu.memory_space<vmem>>, vector<8x128xbf16>,
    %cst_35 = arith.constant 1.66666663 : f32
    %95 = vector.broadcast %cst_35 : f32 to vector<8x128xf32>
    %96 = arith.mulf %95, %85 : vector<8x128xf32>
    %cst_36 = arith.constant 0.000000e+00 : f32
    %97 = vector.broadcast %cst_36 : f32 to vector<8x128xf32>
    %98 = arith.addf %96, %97 : vector<8x128xf32>
    %99 = arith.mulf %98, %92 : vector<8x128xf32>
    %cst_37 = arith.constant 6.250000e-01 : f32
    %100 = vector.broadcast %cst_37 : f32 to vector<8x128xf32>
    %101 = arith.mulf %100, %86 : vector<8x128xf32>
    %102 = arith.subf %99, %101 : vector<8x128xf32>
    %103 = arith.truncf %102 : vector<8x128xf32> to vector<8x128xbf16>
    %c0_38 = arith.constant 0 : index
    %c256 = arith.constant 256 : index
    %104 = vector.load %arg5[%c0_38, %c256] : memref<8x768xbf16, #tpu.memory_space<vmem>>, vector<8x128xbf16>
    tpu.vector_store %arg5[%c0_38, %c256], %103 {strides = array<i32>} : memref<8x768xbf16, #tpu.memory_space<vmem>>, vector<8x128xbf16>,
    %cst_39 = arith.constant 1.750000e+00 : f32
    %105 = vector.broadcast %cst_39 : f32 to vector<8x128xf32>
    %106 = arith.mulf %105, %85 : vector<8x128xf32>
    %cst_40 = arith.constant 0.000000e+00 : f32
    %107 = vector.broadcast %cst_40 : f32 to vector<8x128xf32>
    %108 = arith.addf %106, %107 : vector<8x128xf32>
    %109 = arith.mulf %108, %102 : vector<8x128xf32>
    %cst_41 = arith.constant 0.729166686 : f32
    %110 = vector.broadcast %cst_41 : f32 to vector<8x128xf32>
    %111 = arith.mulf %110, %92 : vector<8x128xf32>
    %112 = arith.subf %109, %111 : vector<8x128xf32>
    %113 = arith.truncf %112 : vector<8x128xf32> to vector<8x128xbf16>
    %c0_42 = arith.constant 0 : index
    %c384 = arith.constant 384 : index
    %114 = vector.load %arg5[%c0_42, %c384] : memref<8x768xbf16, #tpu.memory_space<vmem>>, vector<8x128xbf16>
    tpu.vector_store %arg5[%c0_42, %c384], %113 {strides = array<i32>} : memref<8x768xbf16, #tpu.memory_space<vmem>>, vector<8x128xbf16>,
    %cst_43 = arith.constant 1.800000e+00 : f32
    %115 = vector.broadcast %cst_43 : f32 to vector<8x128xf32>
    %116 = arith.mulf %115, %85 : vector<8x128xf32>
    %cst_44 = arith.constant 0.000000e+00 : f32
    %117 = vector.broadcast %cst_44 : f32 to vector<8x128xf32>
    %118 = arith.addf %116, %117 : vector<8x128xf32>
    %119 = arith.mulf %118, %112 : vector<8x128xf32>
    %cst_45 = arith.constant 7.875000e-01 : f32
    %120 = vector.broadcast %cst_45 : f32 to vector<8x128xf32>
    %121 = arith.mulf %120, %102 : vector<8x128xf32>
    %122 = arith.subf %119, %121 : vector<8x128xf32>
    %123 = arith.truncf %122 : vector<8x128xf32> to vector<8x128xbf16>
    %c0_46 = arith.constant 0 : index
    %c512 = arith.constant 512 : index
    %124 = vector.load %arg5[%c0_46, %c512] : memref<8x768xbf16, #tpu.memory_space<vmem>>, vector<8x128xbf16>
    tpu.vector_store %arg5[%c0_46, %c512], %123 {strides = array<i32>} : memref<8x768xbf16, #tpu.memory_space<vmem>>, vector<8x128xbf16>,
    %cst_47 = arith.constant 1.83333337 : f32
    %125 = vector.broadcast %cst_47 : f32 to vector<8x128xf32>
    %126 = arith.mulf %125, %85 : vector<8x128xf32>
    %cst_48 = arith.constant 0.000000e+00 : f32
    %127 = vector.broadcast %cst_48 : f32 to vector<8x128xf32>
    %128 = arith.addf %126, %127 : vector<8x128xf32>
    %129 = arith.mulf %128, %122 : vector<8x128xf32>
    %cst_49 = arith.constant 0.824999988 : f32
    %130 = vector.broadcast %cst_49 : f32 to vector<8x128xf32>
    %131 = arith.mulf %130, %112 : vector<8x128xf32>
    %132 = arith.subf %129, %131 : vector<8x128xf32>
    %133 = arith.truncf %132 : vector<8x128xf32> to vector<8x128xbf16>
    %c0_50 = arith.constant 0 : index
    %c640 = arith.constant 640 : index
    %134 = vector.load %arg5[%c0_50, %c640] : memref<8x768xbf16, #tpu.memory_space<vmem>>, vector<8x128xbf16>
    tpu.vector_store %arg5[%c0_50, %c640], %133 {strides = array<i32>} : memref<8x768xbf16, #tpu.memory_space<vmem>>, vector<8x128xbf16>,
    %c0_51 = arith.constant 0 : index
    %c0_52 = arith.constant 0 : index
    %135 = vector.load %arg5[%c0_51, %c0_52] : memref<8x768xbf16, #tpu.memory_space<vmem>>, vector<8x768xbf16>
    %c0_53 = arith.constant 0 : index
    %c0_54 = arith.constant 0 : index
    %136 = vector.load %arg3[%c0_53, %c0_54] : memref<768x128xbf16, #tpu.memory_space<vmem>>, vector<768x128xbf16>
    %cst_55 = arith.constant dense<0.000000e+00> : vector<8x128xf32>
    %137 = tpu.matmul %135, %136, %cst_55 {dimension_numbers = #tpu.dot_dimension_numbers<[1], [0], [0], [1], [0, 0, 1, 1], [], []>} : vector<8x768xbf16>, vector<768x128xbf16>, vector<8x128xf32> -> vector<8x128xf32>
    %c0_56 = arith.constant 0 : index
    %c0_57 = arith.constant 0 : index
    %138 = vector.load %arg4[%c0_56, %c0_57] : memref<8x128xf32, #tpu.memory_space<vmem>>, vector<8x128xf32>
    tpu.vector_store %arg4[%c0_56, %c0_57], %137 {strides = array<i32>} : memref<8x128xf32, #tpu.memory_space<vmem>>, vector<8x128xf32>,
    return
  }
  func.func @transform_0(%arg0: i32) -> (i32, i32) {
    %c0_i32 = arith.constant 0 : i32
    %c0_i32_0 = arith.constant 0 : i32
    return %arg0, %c0_i32 : i32, i32
  }
  func.func @transform_1(%arg0: i32) -> (i32, i32) {
    %c0_i32 = arith.constant 0 : i32
    %c0_i32_0 = arith.constant 0 : i32
    %c0_i32_1 = arith.constant 0 : i32
    return %c0_i32, %c0_i32_0 : i32, i32
  }
  func.func @transform_2(%arg0: i32) -> (i32, i32) {
    %c0_i32 = arith.constant 0 : i32
    %c0_i32_0 = arith.constant 0 : i32
    %c0_i32_1 = arith.constant 0 : i32
    return %c0_i32, %c0_i32_0 : i32, i32
  }
  func.func @transform_3(%arg0: i32) -> (i32, i32) {
    %c0_i32 = arith.constant 0 : i32
    %c0_i32_0 = arith.constant 0 : i32
    return %arg0, %c0_i32 : i32, i32
  }
}

module attributes {stable_mosaic.version = 11 : i64} {
  func.func @_fused_kan_kernel(%arg0: i32, %arg1: memref<8x128xf32, #tpu.memory_space<vmem>>, %arg2: memref<128x128xbf16, #tpu.memory_space<vmem>>, %arg3: memref<768x128xbf16, #tpu.memory_space<vmem>>, %arg4: memref<8x128xf32, #tpu.memory_space<vmem>>, %arg5: memref<8x768xbf16, #tpu.memory_space<vmem>>) attributes {dimension_semantics = [#tpu.dimension_semantics<parallel>], iteration_bounds = array<i64: 1>, scalar_prefetch = 0 : i64, scratch_operands = 1 : i64, tpu.core_type = #tpu.core_type<tc>, window_params = [{transform_indices = @transform_0, window_bounds = array<i64: 8, 128>}, {pipeline_mode = #tpu.pipeline_mode<synchronous>, transform_indices = @transform_1, window_bounds = array<i64: 128, 128>}, {pipeline_mode = #tpu.pipeline_mode<synchronous>, transform_indices = @transform_2, window_bounds = array<i64: 768, 128>}, {transform_indices = @transform_3, window_bounds = array<i64: 8, 128>}]} {
    %c0 = arith.constant 0 : index
    %c0_0 = arith.constant 0 : index
    %0 = vector.load %arg1[%c0, %c0_0] : memref<8x128xf32, #tpu.memory_space<vmem>>, vector<8x128xf32>
    %1 = math.tanh %0 : vector<8x128xf32>
    %2 = tpu.iota {dimensions = array<i32: 1>} : vector<8x128xi32>
    %cst = arith.constant 0.000000e+00 : f32
    %3 = vector.broadcast %cst : f32 to vector<8x128xf32>
    %cst_1 = arith.constant 1.000000e+00 : f32
    %4 = vector.broadcast %cst_1 : f32 to vector<8x128xf32>
    %c0_i32 = arith.constant 0 : i32
    %5 = vector.broadcast %c0_i32 : i32 to vector<8x128xi32>
    %6 = arith.cmpi sge, %2, %5 : vector<8x128xi32>
    %c4_i32 = arith.constant 4 : i32
    %7 = vector.broadcast %c4_i32 : i32 to vector<8x128xi32>
    %8 = arith.cmpi slt, %2, %7 : vector<8x128xi32>
    %9 = arith.andi %6, %8 : vector<8x128xi1>
    %10 = arith.select %9, %4, %3 : vector<8x128xi1>, vector<8x128xf32>
    %cst_2 = arith.constant 1.500000e+00 : f32
    %11 = vector.broadcast %cst_2 : f32 to vector<8x128xf32>
    %12 = arith.mulf %11, %1 : vector<8x128xf32>
    %cst_3 = arith.constant 0.000000e+00 : f32
    %13 = vector.broadcast %cst_3 : f32 to vector<8x128xf32>
    %14 = arith.subf %12, %13 : vector<8x128xf32>
    %c4_i32_4 = arith.constant 4 : i32
    %15 = tpu.dynamic_rotate %14 by %c4_i32_4 dim 1 : vector<8x128xf32>, i32 -> vector<8x128xf32>
    %c4_i32_5 = arith.constant 4 : i32
    %16 = vector.broadcast %c4_i32_5 : i32 to vector<8x128xi32>
    %17 = arith.cmpi sge, %2, %16 : vector<8x128xi32>
    %c8_i32 = arith.constant 8 : i32
    %18 = vector.broadcast %c8_i32 : i32 to vector<8x128xi32>
    %19 = arith.cmpi slt, %2, %18 : vector<8x128xi32>
    %20 = arith.andi %17, %19 : vector<8x128xi1>
    %21 = arith.select %20, %15, %10 : vector<8x128xi1>, vector<8x128xf32>
    %cst_6 = arith.constant 1.66666663 : f32
    %22 = vector.broadcast %cst_6 : f32 to vector<8x128xf32>
    %23 = arith.mulf %22, %1 : vector<8x128xf32>
    %cst_7 = arith.constant 0.000000e+00 : f32
    %24 = vector.broadcast %cst_7 : f32 to vector<8x128xf32>
    %25 = arith.addf %23, %24 : vector<8x128xf32>
    %26 = arith.mulf %25, %14 : vector<8x128xf32>
    %cst_8 = arith.constant 6.250000e-01 : f32
    %27 = vector.broadcast %cst_8 : f32 to vector<8x128xf32>
    %28 = arith.mulf %27, %4 : vector<8x128xf32>
    %29 = arith.subf %26, %28 : vector<8x128xf32>
    %c8_i32_9 = arith.constant 8 : i32
    %30 = tpu.dynamic_rotate %29 by %c8_i32_9 dim 1 : vector<8x128xf32>, i32 -> vector<8x128xf32>
    %c8_i32_10 = arith.constant 8 : i32
    %31 = vector.broadcast %c8_i32_10 : i32 to vector<8x128xi32>
    %32 = arith.cmpi sge, %2, %31 : vector<8x128xi32>
    %c12_i32 = arith.constant 12 : i32
    %33 = vector.broadcast %c12_i32 : i32 to vector<8x128xi32>
    %34 = arith.cmpi slt, %2, %33 : vector<8x128xi32>
    %35 = arith.andi %32, %34 : vector<8x128xi1>
    %36 = arith.select %35, %30, %21 : vector<8x128xi1>, vector<8x128xf32>
    %cst_11 = arith.constant 1.750000e+00 : f32
    %37 = vector.broadcast %cst_11 : f32 to vector<8x128xf32>
    %38 = arith.mulf %37, %1 : vector<8x128xf32>
    %cst_12 = arith.constant 0.000000e+00 : f32
    %39 = vector.broadcast %cst_12 : f32 to vector<8x128xf32>
    %40 = arith.addf %38, %39 : vector<8x128xf32>
    %41 = arith.mulf %40, %29 : vector<8x128xf32>
    %cst_13 = arith.constant 0.729166686 : f32
    %42 = vector.broadcast %cst_13 : f32 to vector<8x128xf32>
    %43 = arith.mulf %42, %14 : vector<8x128xf32>
    %44 = arith.subf %41, %43 : vector<8x128xf32>
    %c12_i32_14 = arith.constant 12 : i32
    %45 = tpu.dynamic_rotate %44 by %c12_i32_14 dim 1 : vector<8x128xf32>, i32 -> vector<8x128xf32>
    %c12_i32_15 = arith.constant 12 : i32
    %46 = vector.broadcast %c12_i32_15 : i32 to vector<8x128xi32>
    %47 = arith.cmpi sge, %2, %46 : vector<8x128xi32>
    %c16_i32 = arith.constant 16 : i32
    %48 = vector.broadcast %c16_i32 : i32 to vector<8x128xi32>
    %49 = arith.cmpi slt, %2, %48 : vector<8x128xi32>
    %50 = arith.andi %47, %49 : vector<8x128xi1>
    %51 = arith.select %50, %45, %36 : vector<8x128xi1>, vector<8x128xf32>
    %cst_16 = arith.constant 1.800000e+00 : f32
    %52 = vector.broadcast %cst_16 : f32 to vector<8x128xf32>
    %53 = arith.mulf %52, %1 : vector<8x128xf32>
    %cst_17 = arith.constant 0.000000e+00 : f32
    %54 = vector.broadcast %cst_17 : f32 to vector<8x128xf32>
    %55 = arith.addf %53, %54 : vector<8x128xf32>
    %56 = arith.mulf %55, %44 : vector<8x128xf32>
    %cst_18 = arith.constant 7.875000e-01 : f32
    %57 = vector.broadcast %cst_18 : f32 to vector<8x128xf32>
    %58 = arith.mulf %57, %29 : vector<8x128xf32>
    %59 = arith.subf %56, %58 : vector<8x128xf32>
    %c16_i32_19 = arith.constant 16 : i32
    %60 = tpu.dynamic_rotate %59 by %c16_i32_19 dim 1 : vector<8x128xf32>, i32 -> vector<8x128xf32>
    %c16_i32_20 = arith.constant 16 : i32
    %61 = vector.broadcast %c16_i32_20 : i32 to vector<8x128xi32>
    %62 = arith.cmpi sge, %2, %61 : vector<8x128xi32>
    %c20_i32 = arith.constant 20 : i32
    %63 = vector.broadcast %c20_i32 : i32 to vector<8x128xi32>
    %64 = arith.cmpi slt, %2, %63 : vector<8x128xi32>
    %65 = arith.andi %62, %64 : vector<8x128xi1>
    %66 = arith.select %65, %60, %51 : vector<8x128xi1>, vector<8x128xf32>
    %cst_21 = arith.constant 1.83333337 : f32
    %67 = vector.broadcast %cst_21 : f32 to vector<8x128xf32>
    %68 = arith.mulf %67, %1 : vector<8x128xf32>
    %cst_22 = arith.constant 0.000000e+00 : f32
    %69 = vector.broadcast %cst_22 : f32 to vector<8x128xf32>
    %70 = arith.addf %68, %69 : vector<8x128xf32>
    %71 = arith.mulf %70, %59 : vector<8x128xf32>
    %cst_23 = arith.constant 0.824999988 : f32
    %72 = vector.broadcast %cst_23 : f32 to vector<8x128xf32>
    %73 = arith.mulf %72, %44 : vector<8x128xf32>
    %74 = arith.subf %71, %73 : vector<8x128xf32>
    %c20_i32_24 = arith.constant 20 : i32
    %75 = tpu.dynamic_rotate %74 by %c20_i32_24 dim 1 : vector<8x128xf32>, i32 -> vector<8x128xf32>
    %c20_i32_25 = arith.constant 20 : i32
    %76 = vector.broadcast %c20_i32_25 : i32 to vector<8x128xi32>
    %77 = arith.cmpi sge, %2, %76 : vector<8x128xi32>
    %c24_i32 = arith.constant 24 : i32
    %78 = vector.broadcast %c24_i32 : i32 to vector<8x128xi32>
    %79 = arith.cmpi slt, %2, %78 : vector<8x128xi32>
    %80 = arith.andi %77, %79 : vector<8x128xi1>
    %81 = arith.select %80, %75, %66 : vector<8x128xi1>, vector<8x128xf32>
    %82 = arith.truncf %81 : vector<8x128xf32> to vector<8x128xbf16>
    %c0_26 = arith.constant 0 : index
    %c0_27 = arith.constant 0 : index
    %83 = vector.load %arg2[%c0_26, %c0_27] : memref<128x128xbf16, #tpu.memory_space<vmem>>, vector<128x128xbf16>
    %cst_28 = arith.constant dense<0.000000e+00> : vector<8x128xf32>
    %84 = tpu.matmul %82, %83, %cst_28 {dimension_numbers = #tpu.dot_dimension_numbers<[1], [0], [0], [1], [0, 0, 1, 1], [], []>} : vector<8x128xbf16>, vector<128x128xbf16>, vector<8x128xf32> -> vector<8x128xf32>
    %85 = math.tanh %84 : vector<8x128xf32>
    %cst_29 = arith.constant 1.000000e+00 : f32
    %86 = vector.broadcast %cst_29 : f32 to vector<8x128xf32>
    %87 = arith.truncf %86 : vector<8x128xf32> to vector<8x128xbf16>
    %c0_30 = arith.constant 0 : index
    %c0_31 = arith.constant 0 : index
    %88 = vector.load %arg5[%c0_30, %c0_31] : memref<8x768xbf16, #tpu.memory_space<vmem>>, vector<8x128xbf16>
    tpu.vector_store %arg5[%c0_30, %c0_31], %87 {strides = array<i32>} : memref<8x768xbf16, #tpu.memory_space<vmem>>, vector<8x128xbf16>,
    %cst_32 = arith.constant 1.500000e+00 : f32
    %89 = vector.broadcast %cst_32 : f32 to vector<8x128xf32>
    %90 = arith.mulf %89, %85 : vector<8x128xf32>
    %cst_33 = arith.constant 0.000000e+00 : f32
    %91 = vector.broadcast %cst_33 : f32 to vector<8x128xf32>
    %92 = arith.subf %90, %91 : vector<8x128xf32>
    %93 = arith.truncf %92 : vector<8x128xf32> to vector<8x128xbf16>
    %c0_34 = arith.constant 0 : index
    %c128 = arith.constant 128 : index
    %94 = vector.load %arg5[%c0_34, %c128] : memref<8x768xbf16, #tpu.memory_space<vmem>>, vector<8x128xbf16>
    tpu.vector_store %arg5[%c0_34, %c128], %93 {strides = array<i32>} : memref<8x768xbf16, #tpu.memory_space<vmem>>, vector<8x128xbf16>,
    %cst_35 = arith.constant 1.66666663 : f32
    %95 = vector.broadcast %cst_35 : f32 to vector<8x128xf32>
    %96 = arith.mulf %95, %85 : vector<8x128xf32>
    %cst_36 = arith.constant 0.000000e+00 : f32
    %97 = vector.broadcast %cst_36 : f32 to vector<8x128xf32>
    %98 = arith.addf %96, %97 : vector<8x128xf32>
    %99 = arith.mulf %98, %92 : vector<8x128xf32>
    %cst_37 = arith.constant 6.250000e-01 : f32
    %100 = vector.broadcast %cst_37 : f32 to vector<8x128xf32>
    %101 = arith.mulf %100, %86 : vector<8x128xf32>
    %102 = arith.subf %99, %101 : vector<8x128xf32>
    %103 = arith.truncf %102 : vector<8x128xf32> to vector<8x128xbf16>
    %c0_38 = arith.constant 0 : index
    %c256 = arith.constant 256 : index
    %104 = vector.load %arg5[%c0_38, %c256] : memref<8x768xbf16, #tpu.memory_space<vmem>>, vector<8x128xbf16>
    tpu.vector_store %arg5[%c0_38, %c256], %103 {strides = array<i32>} : memref<8x768xbf16, #tpu.memory_space<vmem>>, vector<8x128xbf16>,
    %cst_39 = arith.constant 1.750000e+00 : f32
    %105 = vector.broadcast %cst_39 : f32 to vector<8x128xf32>
    %106 = arith.mulf %105, %85 : vector<8x128xf32>
    %cst_40 = arith.constant 0.000000e+00 : f32
    %107 = vector.broadcast %cst_40 : f32 to vector<8x128xf32>
    %108 = arith.addf %106, %107 : vector<8x128xf32>
    %109 = arith.mulf %108, %102 : vector<8x128xf32>
    %cst_41 = arith.constant 0.729166686 : f32
    %110 = vector.broadcast %cst_41 : f32 to vector<8x128xf32>
    %111 = arith.mulf %110, %92 : vector<8x128xf32>
    %112 = arith.subf %109, %111 : vector<8x128xf32>
    %113 = arith.truncf %112 : vector<8x128xf32> to vector<8x128xbf16>
    %c0_42 = arith.constant 0 : index
    %c384 = arith.constant 384 : index
    %114 = vector.load %arg5[%c0_42, %c384] : memref<8x768xbf16, #tpu.memory_space<vmem>>, vector<8x128xbf16>
    tpu.vector_store %arg5[%c0_42, %c384], %113 {strides = array<i32>} : memref<8x768xbf16, #tpu.memory_space<vmem>>, vector<8x128xbf16>,
    %cst_43 = arith.constant 1.800000e+00 : f32
    %115 = vector.broadcast %cst_43 : f32 to vector<8x128xf32>
    %116 = arith.mulf %115, %85 : vector<8x128xf32>
    %cst_44 = arith.constant 0.000000e+00 : f32
    %117 = vector.broadcast %cst_44 : f32 to vector<8x128xf32>
    %118 = arith.addf %116, %117 : vector<8x128xf32>
    %119 = arith.mulf %118, %112 : vector<8x128xf32>
    %cst_45 = arith.constant 7.875000e-01 : f32
    %120 = vector.broadcast %cst_45 : f32 to vector<8x128xf32>
    %121 = arith.mulf %120, %102 : vector<8x128xf32>
    %122 = arith.subf %119, %121 : vector<8x128xf32>
    %123 = arith.truncf %122 : vector<8x128xf32> to vector<8x128xbf16>
    %c0_46 = arith.constant 0 : index
    %c512 = arith.constant 512 : index
    %124 = vector.load %arg5[%c0_46, %c512] : memref<8x768xbf16, #tpu.memory_space<vmem>>, vector<8x128xbf16>
    tpu.vector_store %arg5[%c0_46, %c512], %123 {strides = array<i32>} : memref<8x768xbf16, #tpu.memory_space<vmem>>, vector<8x128xbf16>,
    %cst_47 = arith.constant 1.83333337 : f32
    %125 = vector.broadcast %cst_47 : f32 to vector<8x128xf32>
    %126 = arith.mulf %125, %85 : vector<8x128xf32>
    %cst_48 = arith.constant 0.000000e+00 : f32
    %127 = vector.broadcast %cst_48 : f32 to vector<8x128xf32>
    %128 = arith.addf %126, %127 : vector<8x128xf32>
    %129 = arith.mulf %128, %122 : vector<8x128xf32>
    %cst_49 = arith.constant 0.824999988 : f32
    %130 = vector.broadcast %cst_49 : f32 to vector<8x128xf32>
    %131 = arith.mulf %130, %112 : vector<8x128xf32>
    %132 = arith.subf %129, %131 : vector<8x128xf32>
    %133 = arith.truncf %132 : vector<8x128xf32> to vector<8x128xbf16>
    %c0_50 = arith.constant 0 : index
    %c640 = arith.constant 640 : index
    %134 = vector.load %arg5[%c0_50, %c640] : memref<8x768xbf16, #tpu.memory_space<vmem>>, vector<8x128xbf16>
    tpu.vector_store %arg5[%c0_50, %c640], %133 {strides = array<i32>} : memref<8x768xbf16, #tpu.memory_space<vmem>>, vector<8x128xbf16>,
    %c0_51 = arith.constant 0 : index
    %c0_52 = arith.constant 0 : index
    %135 = vector.load %arg5[%c0_51, %c0_52] : memref<8x768xbf16, #tpu.memory_space<vmem>>, vector<8x768xbf16>
    %c0_53 = arith.constant 0 : index
    %c0_54 = arith.constant 0 : index
    %136 = vector.load %arg3[%c0_53, %c0_54] : memref<768x128xbf16, #tpu.memory_space<vmem>>, vector<768x128xbf16>
    %cst_55 = arith.constant dense<0.000000e+00> : vector<8x128xf32>
    %137 = tpu.matmul %135, %136, %cst_55 {dimension_numbers = #tpu.dot_dimension_numbers<[1], [0], [0], [1], [0, 0, 1, 1], [], []>} : vector<8x768xbf16>, vector<768x128xbf16>, vector<8x128xf32> -> vector<8x128xf32>
    %c0_56 = arith.constant 0 : index
    %c0_57 = arith.constant 0 : index
    %138 = vector.load %arg4[%c0_56, %c0_57] : memref<8x128xf32, #tpu.memory_space<vmem>>, vector<8x128xf32>
    tpu.vector_store %arg4[%c0_56, %c0_57], %137 {strides = array<i32>} : memref<8x128xf32, #tpu.memory_space<vmem>>, vector<8x128xf32>,
    return
  }
  func.func @transform_0(%arg0: i32) -> (i32, i32) {
    %c0_i32 = arith.constant 0 : i32
    %c0_i32_0 = arith.constant 0 : i32
    return %arg0, %c0_i32 : i32, i32
  }
  func.func @transform_1(%arg0: i32) -> (i32, i32) {
    %c0_i32 = arith.constant 0 : i32
    %c0_i32_0 = arith.constant 0 : i32
    %c0_i32_1 = arith.constant 0 : i32
    return %c0_i32, %c0_i32_0 : i32, i32
  }
  func.func @transform_2(%arg0: i32) -> (i32, i32) {
    %c0_i32 = arith.constant 0 : i32
    %c0_i32_0 = arith.constant 0 : i32
    %c0_i32_1 = arith.constant 0 : i32
    return %c0_i32, %c0_i32_0 : i32, i32
  }
  func.func @transform_3(%arg0: i32) -> (i32, i32) {
    %c0_i32 = arith.constant 0 : i32
    %c0_i32_0 = arith.constant 0 : i32
    return %arg0, %c0_i32 : i32, i32
  }
}

</mosaic_0001>

<llo_original>
// kernel: tpu_custom_call.1
$region0: #{tpu_custom_call.1}
  #allocation0 [shape = 'u32[]', space=smem, size = 0x4, offset = 0x4, fixed_abs, tag = 'smem constant byte address 0x4 - core index']
  #allocation1 [shape = 'u32[144,128]{1,0:T(1,128)}', space=vmem, size = 0x12000, scoped, tag = 'internal scratch']
  #allocation2 [shape = 'bf16[8,768]{1,0:T(8,128)(2,1)}', space=vmem, size = 0x3000, scoped, tag = 'scratch operand']
  %s0 = inlined_call_operand.hbm [shape: f32[8,128], index: 0, kind: input, shape index: {}]
  %s1 = inlined_call_operand.hbm [shape: bf16[128,128], index: 1, kind: input, shape index: {}]
  %s2 = inlined_call_operand.hbm [shape: bf16[768,128], index: 2, kind: input, shape index: {}]
  %s3 = inlined_call_operand.hbm [shape: f32[8,128], index: 3, kind: output, shape index: {}]
  %s4 = sld [smem:[#allocation0]]
  $region34: #{tpu_custom_call.1} parent=0
    _
  %s6 = ssub.s32 1, %s4
  %s7 = scalar_select 0, %s6, %s4
  $region1: #{tpu_custom_call.1} parent=0
    #allocation3 [shape = 'u8[4096]{0}', space=vmem, size = 0x1000, scoped, tag = 'input window, operand 0, single buffered']
    #allocation4 [shape = 's32[1]{0}', space=sflag, size = 0x4, scoped, tag = 'scoped memory for tpu_custom_call.1']
    #allocation5 [shape = 's32[1]{0}', space=sflag, size = 0x4, scoped, tag = 'scoped memory for tpu_custom_call.1']
    #allocation6 [shape = 'u8[32768]{0}', space=vmem, size = 0x8000, scoped, tag = 'input window, operand 1, single buffered']
    #allocation7 [shape = 's32[1]{0}', space=sflag, size = 0x4, scoped, tag = 'scoped memory for tpu_custom_call.1']
    #allocation8 [shape = 'u8[196608]{0}', space=vmem, size = 0x30000, scoped, tag = 'input window, operand 2, single buffered']
    #allocation9 [shape = 'u8[4096]{0}', space=vmem, size = 0x1000, scoped, tag = 'output window, operand 0, single buffered']
    %8 = vsyncpa [#allocation4], 0
    %9 = vsyncpa [#allocation7], 0
    %10 = vsyncpa [#allocation5], 0
    // Predicated region
    $region2: #{tpu_custom_call.1} parent=1 // pred_check
      _
    $region3: #{tpu_custom_call.1} parent=1 // pred_check_branch
      %12 = sbr.rel (0) target = $region5
    $region4: #{tpu_custom_call.1} parent=1 // pred_region
      %s14 = ssub.s32 128, 128
      %15 = vsyncadd [#allocation4], %s14
      %s17 = sshll.u32 [#allocation3], 4
      %s18 = int_to_ptr.vmem [resolvable:$true] %s17
      %20 = dma.hbm_to_vmem [thread:$0]  %s0, 128, %s18, [#allocation4]
    $region5: #{tpu_custom_call.1} parent=1 // pred_fallthru
      _
    // Predicated region
    $region6: #{tpu_custom_call.1} parent=1 // pred_check
      _
    $region7: #{tpu_custom_call.1} parent=1 // pred_check_branch
      %22 = sbr.rel (0) target = $region9
    $region8: #{tpu_custom_call.1} parent=1 // pred_region
      %s24 = ssub.s32 1024, 1024
      %25 = vsyncadd [#allocation7], %s24
      %s26 = sshll.u32 [#allocation6], 4
      %s27 = int_to_ptr.vmem [resolvable:$true] %s26
      %32 = dma.hbm_to_vmem [thread:$0]  %s1, 1024, %s27, [#allocation7], 64, 64, 4
    $region9: #{tpu_custom_call.1} parent=1 // pred_fallthru
      _
    // Predicated region
    $region10: #{tpu_custom_call.1} parent=1 // pred_check
      _
    $region11: #{tpu_custom_call.1} parent=1 // pred_check_branch
      %34 = sbr.rel (0) target = $region13
    $region12: #{tpu_custom_call.1} parent=1 // pred_region
      %s36 = ssub.s32 6144, 6144
      %37 = vsyncadd [#allocation7], %s36
      %s38 = sshll.u32 [#allocation8], 4
      %s39 = int_to_ptr.vmem [resolvable:$true] %s38
      %44 = dma.hbm_to_vmem [thread:$0]  %s2, 6144, %s39, [#allocation7], 64, 64, 4
    $region13: #{tpu_custom_call.1} parent=1 // pred_fallthru
      _
    // Predicated region
    $region14: #{tpu_custom_call.1} parent=1 // pred_check
      _
    $region15: #{tpu_custom_call.1} parent=1 // pred_check_branch
      %46 = sbr.rel (0) target = $region17
    $region16: #{tpu_custom_call.1} parent=1 // pred_region
      %47 = dma.done [#allocation4], 128
    $region17: #{tpu_custom_call.1} parent=1 // pred_fallthru
      _
    // Predicated region
    $region18: #{tpu_custom_call.1} parent=1 // pred_check
      _
    $region19: #{tpu_custom_call.1} parent=1 // pred_check_branch
      %49 = sbr.rel (0) target = $region21
    $region20: #{tpu_custom_call.1} parent=1 // pred_region
      %50 = dma.done [#allocation7], 1024
    $region21: #{tpu_custom_call.1} parent=1 // pred_fallthru
      _
    // Predicated region
    $region22: #{tpu_custom_call.1} parent=1 // pred_check
      _
    $region23: #{tpu_custom_call.1} parent=1 // pred_check_branch
      %52 = sbr.rel (0) target = $region25
    $region24: #{tpu_custom_call.1} parent=1 // pred_region
      %53 = dma.done [#allocation7], 6144
    $region25: #{tpu_custom_call.1} parent=1 // pred_fallthru
      _
    %v56 = vld [vmem:[#allocation3] sm:$0xff]
    %v57 = vtanh.pop %v56
    %v58 = vlaneseq
    %v59 = vand.u32 %v58, 127
    %vm60 = vcmp.ge.s32.totalorder %v59, 0
    %vm61 = vcmp.lt.s32.totalorder %v59, 4
    %vm62 = vmand %vm60, %vm61
    %v63 = vsel %vm62, 1.0, 0.0
    %v64 = vmul.f32 %v57, 1.5
    %65 = vrot.lane.b32.xlu0 %v64, 4
    %v66 = vpop.permute.xlu0 %65
    %vm67 = vcmp.ge.s32.totalorder %v59, 4
    %vm68 = vcmp.lt.s32.totalorder %v59, 8
    %vm69 = vmand %vm67, %vm68
    %v70 = vsel %vm69, %v66, %v63
    %v71 = vmul.f32 %v57, 1.6666666
    %v72 = vadd.f32 %v71, 0.0
    %v73 = vmul.f32 %v72, %v64
    %v74 = vsub.f32 %v73, 0.625
    %75 = vrot.lane.b32.xlu0 %v74, 8
    %v76 = vpop.permute.xlu0 %75
    %vm77 = vcmp.ge.s32.totalorder %v59, 8
    %vm78 = vcmp.lt.s32.totalorder %v59, 12
    %vm79 = vmand %vm77, %vm78
    %v80 = vsel %vm79, %v76, %v70
    %v81 = vmul.f32 %v57, 1.75
    %v82 = vadd.f32 %v81, 0.0
    %v83 = vmul.f32 %v82, %v74
    %v84 = vmul.f32 %v64, 0.7291667
    %v85 = vsub.f32 %v83, %v84
    %86 = vrot.lane.b32.xlu0 %v85, 12
    %v87 = vpop.permute.xlu0 %86
    %vm88 = vcmp.ge.s32.totalorder %v59, 12
    %vm89 = vcmp.lt.s32.totalorder %v59, 16
    %vm90 = vmand %vm88, %vm89
    %v91 = vsel %vm90, %v87, %v80
    %v92 = vmul.f32 %v57, 1.8
    %v93 = vadd.f32 %v92, 0.0
    %v94 = vmul.f32 %v93, %v85
    %v95 = vmul.f32 %v74, 0.7875
    %v96 = vsub.f32 %v94, %v95
    %97 = vrot.lane.b32.xlu0 %v96, 16
    %v98 = vpop.permute.xlu0 %97
    %vm99 = vcmp.ge.s32.totalorder %v59, 16
    %vm100 = vcmp.lt.s32.totalorder %v59, 20
    %vm101 = vmand %vm99, %vm100
    %v102 = vsel %vm101, %v98, %v91
    %v103 = vmul.f32 %v57, 1.8333334
    %v104 = vadd.f32 %v103, 0.0
    %v105 = vmul.f32 %v104, %v96
    %v106 = vmul.f32 %v85, 0.825
    %v107 = vsub.f32 %v105, %v106
    %108 = vrot.lane.b32.xlu0 %v107, 20
    %v109 = vpop.permute.xlu0 %108
    %vm110 = vcmp.ge.s32.totalorder %v59, 20
    %vm111 = vcmp.lt.s32.totalorder %v59, 24
    %vm112 = vmand %vm110, %vm111
    %v113 = vsel %vm112, %v109, %v102
    %v114 = vpack.c.bf16 %v113, %v113
    %v115 = vld [vmem:[#allocation6] sm:$0xf]
    %v116 = vld [vmem:[#allocation6 + $0x4] sm:$0xf]
    %v117 = vld [vmem:[#allocation6 + $0x8] sm:$0xf]
    %v118 = vld [vmem:[#allocation6 + $0xc] sm:$0xf]
    %v119 = vld [vmem:[#allocation6 + $0x10] sm:$0xf]
    %v120 = vld [vmem:[#allocation6 + $0x14] sm:$0xf]
    %v121 = vld [vmem:[#allocation6 + $0x18] sm:$0xf]
    %v122 = vld [vmem:[#allocation6 + $0x1c] sm:$0xf]
    %v123 = vld [vmem:[#allocation6 + $0x20] sm:$0xf]
    %v124 = vld [vmem:[#allocation6 + $0x24] sm:$0xf]
    %v125 = vld [vmem:[#allocation6 + $0x28] sm:$0xf]
    %v126 = vld [vmem:[#allocation6 + $0x2c] sm:$0xf]
    %v127 = vld [vmem:[#allocation6 + $0x30] sm:$0xf]
    %v128 = vld [vmem:[#allocation6 + $0x34] sm:$0xf]
    %v129 = vld [vmem:[#allocation6 + $0x38] sm:$0xf]
    %v130 = vld [vmem:[#allocation6 + $0x3c] sm:$0xf]
    %v147 = vunpack.c.l.b16 %v115
    %v148 = vunpack.c.l.b16 %v116
    %v149 = vunpack.c.l.b16 %v117
    %v150 = vunpack.c.l.b16 %v118
    %v151 = vunpack.c.l.b16 %v119
    %v152 = vunpack.c.l.b16 %v120
    %v153 = vunpack.c.l.b16 %v121
    %v154 = vunpack.c.l.b16 %v122
    %v155 = vunpack.c.l.b16 %v123
    %v156 = vunpack.c.l.b16 %v124
    %v157 = vunpack.c.l.b16 %v125
    %v158 = vunpack.c.l.b16 %v126
    %v159 = vunpack.c.l.b16 %v127
    %v160 = vunpack.c.l.b16 %v128
    %v161 = vunpack.c.l.b16 %v129
    %v162 = vunpack.c.l.b16 %v130
    %v163 = vpack.c.b16 %v148, %v147
    %v164 = vpack.c.b16 %v150, %v149
    %v165 = vpack.c.b16 %v152, %v151
    %v166 = vpack.c.b16 %v154, %v153
    %v167 = vpack.c.b16 %v156, %v155
    %v168 = vpack.c.b16 %v158, %v157
    %v169 = vpack.c.b16 %v160, %v159
    %v170 = vpack.c.b16 %v162, %v161
    %179 = vmatprep.subr.bf16.mxu0 0
    %180 = vmatpush1.bf16.msra.mxu0 %v163
    %181 = vmatprep.subr.bf16.mxu0 0
    %182 = vmatpush1.bf16.msra.mxu0 %v164
    %183 = vmatprep.subr.bf16.mxu0 0
    %184 = vmatpush1.bf16.msra.mxu0 %v165
    %185 = vmatprep.subr.bf16.mxu0 0
    %186 = vmatpush1.bf16.msra.mxu0 %v166
    %187 = vmatprep.subr.bf16.mxu0 0
    %188 = vmatpush1.bf16.msra.mxu0 %v167
    %189 = vmatprep.subr.bf16.mxu0 0
    %190 = vmatpush1.bf16.msra.mxu0 %v168
    %191 = vmatprep.subr.bf16.mxu0 0
    %192 = vmatpush1.bf16.msra.mxu0 %v169
    %193 = vmatprep.subr.bf16.mxu0 0
    %194 = vmatpush1.bf16.msra.mxu0 %v170
    %195 = vmatprep.subr.bf16.mxu0 0
    %196 = vmatpush1.bf16.msra.mxu0 0
    %197 = vmatprep.subr.bf16.mxu0 0
    %198 = vmatpush1.bf16.msra.mxu0 0
    %199 = vmatprep.subr.bf16.mxu0 0
    %200 = vmatpush1.bf16.msra.mxu0 0
    %201 = vmatprep.subr.bf16.mxu0 0
    %202 = vmatpush1.bf16.msra.mxu0 0
    %203 = vmatprep.subr.bf16.mxu0 0
    %204 = vmatpush1.bf16.msra.mxu0 0
    %205 = vmatprep.subr.bf16.mxu0 0
    %206 = vmatpush1.bf16.msra.mxu0 0
    %207 = vmatprep.subr.bf16.mxu0 0
    %208 = vmatpush1.bf16.msra.mxu0 0
    %209 = vmatprep.subr.bf16.mxu0 0
    %210 = vmatpush1.bf16.msra.mxu0 0
    %211 = vmatprep.mubr.bf16.mxu0 0
    %212 = vmatmul.mubr.bf16.gmra.mrb[0].mxu0 %v114
    %v213 = vpop.f32.mrb[0].mxu0
    %v214 = vadd.f32 0.0, %v213
    %v215 = vpop.f32.mrb[0].mxu0
    %v216 = vpop.f32.mrb[0].mxu0
    %v217 = vpop.f32.mrb[0].mxu0
    %218 = vdwg.mxu0
    %v219 = vtanh.pop %v214
    %220 = vst [vmem:[#allocation2] sm:$0xf] 1065369472
    %v221 = vmul.f32 %v219, 1.5
    %v222 = vpack.c.bf16 %v221, %v221
    %223 = vst [vmem:[#allocation2 + $0x4] sm:$0xf] %v222
    %v224 = vmul.f32 %v219, 1.6666666
    %v225 = vadd.f32 %v224, 0.0
    %v226 = vmul.f32 %v225, %v221
    %v227 = vsub.f32 %v226, 0.625
    %v228 = vpack.c.bf16 %v227, %v227
    %229 = vst [vmem:[#allocation2 + $0x8] sm:$0xf] %v228
    %v230 = vmul.f32 %v219, 1.75
    %v231 = vadd.f32 %v230, 0.0
    %v232 = vmul.f32 %v231, %v227
    %v233 = vmul.f32 %v221, 0.7291667
    %v234 = vsub.f32 %v232, %v233
    %v235 = vpack.c.bf16 %v234, %v234
    %236 = vst [vmem:[#allocation2 + $0xc] sm:$0xf] %v235
    %v237 = vmul.f32 %v219, 1.8
    %v238 = vadd.f32 %v237, 0.0
    %v239 = vmul.f32 %v238, %v234
    %v240 = vmul.f32 %v227, 0.7875
    %v241 = vsub.f32 %v239, %v240
    %v242 = vpack.c.bf16 %v241, %v241
    %243 = vst [vmem:[#allocation2 + $0x10] sm:$0xf] %v242
    %v244 = vmul.f32 %v219, 1.8333334
    %v245 = vadd.f32 %v244, 0.0
    %v246 = vmul.f32 %v245, %v241
    %v247 = vmul.f32 %v234, 0.825
    %v248 = vsub.f32 %v246, %v247
    %v249 = vpack.c.bf16 %v248, %v248
    %250 = vst [vmem:[#allocation2 + $0x14] sm:$0xf] %v249
    %v251 = vld [vmem:[#allocation2] sm:$0xff]
    %v252 = vld [vmem:[#allocation2 + $0x8] sm:$0xff]
    %v253 = vld [vmem:[#allocation2 + $0x10] sm:$0xff]
    %v254 = vld [vmem:[#allocation8] sm:$0xf]
    %v255 = vld [vmem:[#allocation8 + $0x4] sm:$0xf]
    %v256 = vld [vmem:[#allocation8 + $0x8] sm:$0xf]
    %v257 = vld [vmem:[#allocation8 + $0xc] sm:$0xf]
    %v258 = vld [vmem:[#allocation8 + $0x10] sm:$0xf]
    %v259 = vld [vmem:[#allocation8 + $0x14] sm:$0xf]
    %v260 = vld [vmem:[#allocation8 + $0x18] sm:$0xf]
    %v261 = vld [vmem:[#allocation8 + $0x1c] sm:$0xf]
    %v262 = vld [vmem:[#allocation8 + $0x20] sm:$0xf]
    %v263 = vld [vmem:[#allocation8 + $0x24] sm:$0xf]
    %v264 = vld [vmem:[#allocation8 + $0x28] sm:$0xf]
    %v265 = vld [vmem:[#allocation8 + $0x2c] sm:$0xf]
    %v266 = vld [vmem:[#allocation8 + $0x30] sm:$0xf]
    %v267 = vld [vmem:[#allocation8 + $0x34] sm:$0xf]
    %v268 = vld [vmem:[#allocation8 + $0x38] sm:$0xf]
    %v269 = vld [vmem:[#allocation8 + $0x3c] sm:$0xf]
    %v270 = vld [vmem:[#allocation8 + $0x40] sm:$0xf]
    %v271 = vld [vmem:[#allocation8 + $0x44] sm:$0xf]
    %v272 = vld [vmem:[#allocation8 + $0x48] sm:$0xf]
    %v273 = vld [vmem:[#allocation8 + $0x4c] sm:$0xf]
    %v274 = vld [vmem:[#allocation8 + $0x50] sm:$0xf]
    %v275 = vld [vmem:[#allocation8 + $0x54] sm:$0xf]
    %v276 = vld [vmem:[#allocation8 + $0x58] sm:$0xf]
    %v277 = vld [vmem:[#allocation8 + $0x5c] sm:$0xf]
    %v278 = vld [vmem:[#allocation8 + $0x60] sm:$0xf]
    %v279 = vld [vmem:[#allocation8 + $0x64] sm:$0xf]
    %v280 = vld [vmem:[#allocation8 + $0x68] sm:$0xf]
    %v281 = vld [vmem:[#allocation8 + $0x6c] sm:$0xf]
    %v282 = vld [vmem:[#allocation8 + $0x70] sm:$0xf]
    %v283 = vld [vmem:[#allocation8 + $0x74] sm:$0xf]
    %v284 = vld [vmem:[#allocation8 + $0x78] sm:$0xf]
    %v285 = vld [vmem:[#allocation8 + $0x7c] sm:$0xf]
    %v286 = vld [vmem:[#allocation8 + $0x80] sm:$0xf]
    %v287 = vld [vmem:[#allocation8 + $0x84] sm:$0xf]
    %v288 = vld [vmem:[#allocation8 + $0x88] sm:$0xf]
    %v289 = vld [vmem:[#allocation8 + $0x8c] sm:$0xf]
    %v290 = vld [vmem:[#allocation8 + $0x90] sm:$0xf]
    %v291 = vld [vmem:[#allocation8 + $0x94] sm:$0xf]
    %v292 = vld [vmem:[#allocation8 + $0x98] sm:$0xf]
    %v293 = vld [vmem:[#allocation8 + $0x9c] sm:$0xf]
    %v294 = vld [vmem:[#allocation8 + $0xa0] sm:$0xf]
    %v295 = vld [vmem:[#allocation8 + $0xa4] sm:$0xf]
    %v296 = vld [vmem:[#allocation8 + $0xa8] sm:$0xf]
    %v297 = vld [vmem:[#allocation8 + $0xac] sm:$0xf]
    %v298 = vld [vmem:[#allocation8 + $0xb0] sm:$0xf]
    %v299 = vld [vmem:[#allocation8 + $0xb4] sm:$0xf]
    %v300 = vld [vmem:[#allocation8 + $0xb8] sm:$0xf]
    %v301 = vld [vmem:[#allocation8 + $0xbc] sm:$0xf]
    %v302 = vld [vmem:[#allocation8 + $0xc0] sm:$0xf]
    %v303 = vld [vmem:[#allocation8 + $0xc4] sm:$0xf]
    %v304 = vld [vmem:[#allocation8 + $0xc8] sm:$0xf]
    %v305 = vld [vmem:[#allocation8 + $0xcc] sm:$0xf]
    %v306 = vld [vmem:[#allocation8 + $0xd0] sm:$0xf]
    %v307 = vld [vmem:[#allocation8 + $0xd4] sm:$0xf]
    %v308 = vld [vmem:[#allocation8 + $0xd8] sm:$0xf]
    %v309 = vld [vmem:[#allocation8 + $0xdc] sm:$0xf]
    %v310 = vld [vmem:[#allocation8 + $0xe0] sm:$0xf]
    %v311 = vld [vmem:[#allocation8 + $0xe4] sm:$0xf]
    %v312 = vld [vmem:[#allocation8 + $0xe8] sm:$0xf]
    %v313 = vld [vmem:[#allocation8 + $0xec] sm:$0xf]
    %v314 = vld [vmem:[#allocation8 + $0xf0] sm:$0xf]
    %v315 = vld [vmem:[#allocation8 + $0xf4] sm:$0xf]
    %v316 = vld [vmem:[#allocation8 + $0xf8] sm:$0xf]
    %v317 = vld [vmem:[#allocation8 + $0xfc] sm:$0xf]
    %v318 = vld [vmem:[#allocation8 + $0x100] sm:$0xf]
    %v319 = vld [vmem:[#allocation8 + $0x104] sm:$0xf]
    %v320 = vld [vmem:[#allocation8 + $0x108] sm:$0xf]
    %v321 = vld [vmem:[#allocation8 + $0x10c] sm:$0xf]
    %v322 = vld [vmem:[#allocation8 + $0x110] sm:$0xf]
    %v323 = vld [vmem:[#allocation8 + $0x114] sm:$0xf]
    %v324 = vld [vmem:[#allocation8 + $0x118] sm:$0xf]
    %v325 = vld [vmem:[#allocation8 + $0x11c] sm:$0xf]
    %v326 = vld [vmem:[#allocation8 + $0x120] sm:$0xf]
    %v327 = vld [vmem:[#allocation8 + $0x124] sm:$0xf]
    %v328 = vld [vmem:[#allocation8 + $0x128] sm:$0xf]
    %v329 = vld [vmem:[#allocation8 + $0x12c] sm:$0xf]
    %v330 = vld [vmem:[#allocation8 + $0x130] sm:$0xf]
    %v331 = vld [vmem:[#allocation8 + $0x134] sm:$0xf]
    %v332 = vld [vmem:[#allocation8 + $0x138] sm:$0xf]
    %v333 = vld [vmem:[#allocation8 + $0x13c] sm:$0xf]
    %v334 = vld [vmem:[#allocation8 + $0x140] sm:$0xf]
    %v335 = vld [vmem:[#allocation8 + $0x144] sm:$0xf]
    %v336 = vld [vmem:[#allocation8 + $0x148] sm:$0xf]
    %v337 = vld [vmem:[#allocation8 + $0x14c] sm:$0xf]
    %v338 = vld [vmem:[#allocation8 + $0x150] sm:$0xf]
    %v339 = vld [vmem:[#allocation8 + $0x154] sm:$0xf]
    %v340 = vld [vmem:[#allocation8 + $0x158] sm:$0xf]
    %v341 = vld [vmem:[#allocation8 + $0x15c] sm:$0xf]
    %v342 = vld [vmem:[#allocation8 + $0x160] sm:$0xf]
    %v343 = vld [vmem:[#allocation8 + $0x164] sm:$0xf]
    %v344 = vld [vmem:[#allocation8 + $0x168] sm:$0xf]
    %v345 = vld [vmem:[#allocation8 + $0x16c] sm:$0xf]
    %v346 = vld [vmem:[#allocation8 + $0x170] sm:$0xf]
    %v347 = vld [vmem:[#allocation8 + $0x174] sm:$0xf]
    %v348 = vld [vmem:[#allocation8 + $0x178] sm:$0xf]
    %v349 = vld [vmem:[#allocation8 + $0x17c] sm:$0xf]
    %v353 = vunpack.c.l.b16 %v251
    %v354 = vunpack.c.h.b16 %v251
    %v355 = vunpack.c.l.b16 %v252
    %v356 = vunpack.c.h.b16 %v252
    %v357 = vunpack.c.l.b16 %v253
    %v358 = vunpack.c.h.b16 %v253
    %v359 = vpack.c.b16 %v353, %v353
    %v360 = vpack.c.b16 %v354, %v354
    %v361 = vpack.c.b16 %v355, %v355
    %v362 = vpack.c.b16 %v356, %v356
    %v363 = vpack.c.b16 %v357, %v357
    %v364 = vpack.c.b16 %v358, %v358
    %v467 = vunpack.c.l.b16 %v254
    %v468 = vunpack.c.l.b16 %v255
    %v469 = vunpack.c.l.b16 %v256
    %v470 = vunpack.c.l.b16 %v257
    %v471 = vunpack.c.l.b16 %v258
    %v472 = vunpack.c.l.b16 %v259
    %v473 = vunpack.c.l.b16 %v260
    %v474 = vunpack.c.l.b16 %v261
    %v475 = vunpack.c.l.b16 %v262
    %v476 = vunpack.c.l.b16 %v263
    %v477 = vunpack.c.l.b16 %v264
    %v478 = vunpack.c.l.b16 %v265
    %v479 = vunpack.c.l.b16 %v266
    %v480 = vunpack.c.l.b16 %v267
    %v481 = vunpack.c.l.b16 %v268
    %v482 = vunpack.c.l.b16 %v269
    %v483 = vunpack.c.l.b16 %v270
    %v484 = vunpack.c.l.b16 %v271
    %v485 = vunpack.c.l.b16 %v272
    %v486 = vunpack.c.l.b16 %v273
    %v487 = vunpack.c.l.b16 %v274
    %v488 = vunpack.c.l.b16 %v275
    %v489 = vunpack.c.l.b16 %v276
    %v490 = vunpack.c.l.b16 %v277
    %v491 = vunpack.c.l.b16 %v278
    %v492 = vunpack.c.l.b16 %v279
    %v493 = vunpack.c.l.b16 %v280
    %v494 = vunpack.c.l.b16 %v281
    %v495 = vunpack.c.l.b16 %v282
    %v496 = vunpack.c.l.b16 %v283
    %v497 = vunpack.c.l.b16 %v284
    %v498 = vunpack.c.l.b16 %v285
    %v499 = vunpack.c.l.b16 %v286
    %v500 = vunpack.c.l.b16 %v287
    %v501 = vunpack.c.l.b16 %v288
    %v502 = vunpack.c.l.b16 %v289
    %v503 = vunpack.c.l.b16 %v290
    %v504 = vunpack.c.l.b16 %v291
    %v505 = vunpack.c.l.b16 %v292
    %v506 = vunpack.c.l.b16 %v293
    %v507 = vunpack.c.l.b16 %v294
    %v508 = vunpack.c.l.b16 %v295
    %v509 = vunpack.c.l.b16 %v296
    %v510 = vunpack.c.l.b16 %v297
    %v511 = vunpack.c.l.b16 %v298
    %v512 = vunpack.c.l.b16 %v299
    %v513 = vunpack.c.l.b16 %v300
    %v514 = vunpack.c.l.b16 %v301
    %v515 = vunpack.c.l.b16 %v302
    %v516 = vunpack.c.l.b16 %v303
    %v517 = vunpack.c.l.b16 %v304
    %v518 = vunpack.c.l.b16 %v305
    %v519 = vunpack.c.l.b16 %v306
    %v520 = vunpack.c.l.b16 %v307
    %v521 = vunpack.c.l.b16 %v308
    %v522 = vunpack.c.l.b16 %v309
    %v523 = vunpack.c.l.b16 %v310
    %v524 = vunpack.c.l.b16 %v311
    %v525 = vunpack.c.l.b16 %v312
    %v526 = vunpack.c.l.b16 %v313
    %v527 = vunpack.c.l.b16 %v314
    %v528 = vunpack.c.l.b16 %v315
    %v529 = vunpack.c.l.b16 %v316
    %v530 = vunpack.c.l.b16 %v317
    %v531 = vunpack.c.l.b16 %v318
    %v532 = vunpack.c.l.b16 %v319
    %v533 = vunpack.c.l.b16 %v320
    %v534 = vunpack.c.l.b16 %v321
    %v535 = vunpack.c.l.b16 %v322
    %v536 = vunpack.c.l.b16 %v323
    %v537 = vunpack.c.l.b16 %v324
    %v538 = vunpack.c.l.b16 %v325
    %v539 = vunpack.c.l.b16 %v326
    %v540 = vunpack.c.l.b16 %v327
    %v541 = vunpack.c.l.b16 %v328
    %v542 = vunpack.c.l.b16 %v329
    %v543 = vunpack.c.l.b16 %v330
    %v544 = vunpack.c.l.b16 %v331
    %v545 = vunpack.c.l.b16 %v332
    %v546 = vunpack.c.l.b16 %v333
    %v547 = vunpack.c.l.b16 %v334
    %v548 = vunpack.c.l.b16 %v335
    %v549 = vunpack.c.l.b16 %v336
    %v550 = vunpack.c.l.b16 %v337
    %v551 = vunpack.c.l.b16 %v338
    %v552 = vunpack.c.l.b16 %v339
    %v553 = vunpack.c.l.b16 %v340
    %v554 = vunpack.c.l.b16 %v341
    %v555 = vunpack.c.l.b16 %v342
    %v556 = vunpack.c.l.b16 %v343
    %v557 = vunpack.c.l.b16 %v344
    %v558 = vunpack.c.l.b16 %v345
    %v559 = vunpack.c.l.b16 %v346
    %v560 = vunpack.c.l.b16 %v347
    %v561 = vunpack.c.l.b16 %v348
    %v562 = vunpack.c.l.b16 %v349
    %v563 = vpack.c.b16 %v468, %v467
    %v564 = vpack.c.b16 %v470, %v469
    %v565 = vpack.c.b16 %v472, %v471
    %v566 = vpack.c.b16 %v474, %v473
    %v567 = vpack.c.b16 %v476, %v475
    %v568 = vpack.c.b16 %v478, %v477
    %v569 = vpack.c.b16 %v480, %v479
    %v570 = vpack.c.b16 %v482, %v481
    %v571 = vpack.c.b16 %v484, %v483
    %v572 = vpack.c.b16 %v486, %v485
    %v573 = vpack.c.b16 %v488, %v487
    %v574 = vpack.c.b16 %v490, %v489
    %v575 = vpack.c.b16 %v492, %v491
    %v576 = vpack.c.b16 %v494, %v493
    %v577 = vpack.c.b16 %v496, %v495
    %v578 = vpack.c.b16 %v498, %v497
    %v579 = vpack.c.b16 %v500, %v499
    %v580 = vpack.c.b16 %v502, %v501
    %v581 = vpack.c.b16 %v504, %v503
    %v582 = vpack.c.b16 %v506, %v505
    %v583 = vpack.c.b16 %v508, %v507
    %v584 = vpack.c.b16 %v510, %v509
    %v585 = vpack.c.b16 %v512, %v511
    %v586 = vpack.c.b16 %v514, %v513
    %v587 = vpack.c.b16 %v516, %v515
    %v588 = vpack.c.b16 %v518, %v517
    %v589 = vpack.c.b16 %v520, %v519
    %v590 = vpack.c.b16 %v522, %v521
    %v591 = vpack.c.b16 %v524, %v523
    %v592 = vpack.c.b16 %v526, %v525
    %v593 = vpack.c.b16 %v528, %v527
    %v594 = vpack.c.b16 %v530, %v529
    %v595 = vpack.c.b16 %v532, %v531
    %v596 = vpack.c.b16 %v534, %v533
    %v597 = vpack.c.b16 %v536, %v535
    %v598 = vpack.c.b16 %v538, %v537
    %v599 = vpack.c.b16 %v540, %v539
    %v600 = vpack.c.b16 %v542, %v541
    %v601 = vpack.c.b16 %v544, %v543
    %v602 = vpack.c.b16 %v546, %v545
    %v603 = vpack.c.b16 %v548, %v547
    %v604 = vpack.c.b16 %v550, %v549
    %v605 = vpack.c.b16 %v552, %v551
    %v606 = vpack.c.b16 %v554, %v553
    %v607 = vpack.c.b16 %v556, %v555
    %v608 = vpack.c.b16 %v558, %v557
    %v609 = vpack.c.b16 %v560, %v559
    %v610 = vpack.c.b16 %v562, %v561
    %659 = vmatprep.subr.bf16.mxu0 0
    %660 = vmatpush1.bf16.msra.mxu0 %v563
    %661 = vmatprep.subr.bf16.mxu0 0
    %662 = vmatpush1.bf16.msra.mxu0 %v564
    %663 = vmatprep.subr.bf16.mxu0 0
    %664 = vmatpush1.bf16.msra.mxu0 %v565
    %665 = vmatprep.subr.bf16.mxu0 0
    %666 = vmatpush1.bf16.msra.mxu0 %v566
    %667 = vmatprep.subr.bf16.mxu0 0
    %668 = vmatpush1.bf16.msra.mxu0 %v567
    %669 = vmatprep.subr.bf16.mxu0 0
    %670 = vmatpush1.bf16.msra.mxu0 %v568
    %671 = vmatprep.subr.bf16.mxu0 0
    %672 = vmatpush1.bf16.msra.mxu0 %v569
    %673 = vmatprep.subr.bf16.mxu0 0
    %674 = vmatpush1.bf16.msra.mxu0 %v570
    %675 = vmatprep.subr.bf16.mxu0 0
    %676 = vmatpush1.bf16.msra.mxu0 %v571
    %677 = vmatprep.subr.bf16.mxu0 0
    %678 = vmatpush1.bf16.msra.mxu0 %v572
    %679 = vmatprep.subr.bf16.mxu0 0
    %680 = vmatpush1.bf16.msra.mxu0 %v573
    %681 = vmatprep.subr.bf16.mxu0 0
    %682 = vmatpush1.bf16.msra.mxu0 %v574
    %683 = vmatprep.subr.bf16.mxu0 0
    %684 = vmatpush1.bf16.msra.mxu0 %v575
    %685 = vmatprep.subr.bf16.mxu0 0
    %686 = vmatpush1.bf16.msra.mxu0 %v576
    %687 = vmatprep.subr.bf16.mxu0 0
    %688 = vmatpush1.bf16.msra.mxu0 %v577
    %689 = vmatprep.subr.bf16.mxu0 0
    %690 = vmatpush1.bf16.msra.mxu0 %v578
    %691 = vmatprep.mubr.bf16.mxu0 %v360
    %692 = vmatmul.mubr.bf16.gmra.mrb[0].mxu0 %v359
    %v693 = vpop.f32.mrb[0].mxu0
    %v694 = vadd.f32 0.0, %v693
    %v695 = vpop.f32.mrb[0].mxu0
    %v696 = vpop.f32.mrb[0].mxu0
    %v697 = vpop.f32.mrb[0].mxu0
    %698 = vdwg.mxu0
    %699 = vmatprep.subr.bf16.mxu0 0
    %700 = vmatpush1.bf16.msra.mxu0 %v579
    %701 = vmatprep.subr.bf16.mxu0 0
    %702 = vmatpush1.bf16.msra.mxu0 %v580
    %703 = vmatprep.subr.bf16.mxu0 0
    %704 = vmatpush1.bf16.msra.mxu0 %v581
    %705 = vmatprep.subr.bf16.mxu0 0
    %706 = vmatpush1.bf16.msra.mxu0 %v582
    %707 = vmatprep.subr.bf16.mxu0 0
    %708 = vmatpush1.bf16.msra.mxu0 %v583
    %709 = vmatprep.subr.bf16.mxu0 0
    %710 = vmatpush1.bf16.msra.mxu0 %v584
    %711 = vmatprep.subr.bf16.mxu0 0
    %712 = vmatpush1.bf16.msra.mxu0 %v585
    %713 = vmatprep.subr.bf16.mxu0 0
    %714 = vmatpush1.bf16.msra.mxu0 %v586
    %715 = vmatprep.subr.bf16.mxu0 0
    %716 = vmatpush1.bf16.msra.mxu0 %v587
    %717 = vmatprep.subr.bf16.mxu0 0
    %718 = vmatpush1.bf16.msra.mxu0 %v588
    %719 = vmatprep.subr.bf16.mxu0 0
    %720 = vmatpush1.bf16.msra.mxu0 %v589
    %721 = vmatprep.subr.bf16.mxu0 0
    %722 = vmatpush1.bf16.msra.mxu0 %v590
    %723 = vmatprep.subr.bf16.mxu0 0
    %724 = vmatpush1.bf16.msra.mxu0 %v591
    %725 = vmatprep.subr.bf16.mxu0 0
    %726 = vmatpush1.bf16.msra.mxu0 %v592
    %727 = vmatprep.subr.bf16.mxu0 0
    %728 = vmatpush1.bf16.msra.mxu0 %v593
    %729 = vmatprep.subr.bf16.mxu0 0
    %730 = vmatpush1.bf16.msra.mxu0 %v594
    %731 = vmatprep.mubr.bf16.mxu0 %v362
    %732 = vmatmul.mubr.bf16.gmra.mrb[0].mxu0 %v361
    %v733 = vpop.f32.mrb[0].mxu0
    %v734 = vadd.f32 %v694, %v733
    %v735 = vpop.f32.mrb[0].mxu0
    %v736 = vpop.f32.mrb[0].mxu0
    %v737 = vpop.f32.mrb[0].mxu0
    %738 = vdwg.mxu0
    %739 = vmatprep.subr.bf16.mxu0 0
    %740 = vmatpush1.bf16.msra.mxu0 %v595
    %741 = vmatprep.subr.bf16.mxu0 0
    %742 = vmatpush1.bf16.msra.mxu0 %v596
    %743 = vmatprep.subr.bf16.mxu0 0
    %744 = vmatpush1.bf16.msra.mxu0 %v597
    %745 = vmatprep.subr.bf16.mxu0 0
    %746 = vmatpush1.bf16.msra.mxu0 %v598
    %747 = vmatprep.subr.bf16.mxu0 0
    %748 = vmatpush1.bf16.msra.mxu0 %v599
    %749 = vmatprep.subr.bf16.mxu0 0
    %750 = vmatpush1.bf16.msra.mxu0 %v600
    %751 = vmatprep.subr.bf16.mxu0 0
    %752 = vmatpush1.bf16.msra.mxu0 %v601
    %753 = vmatprep.subr.bf16.mxu0 0
    %754 = vmatpush1.bf16.msra.mxu0 %v602
    %755 = vmatprep.subr.bf16.mxu0 0
    %756 = vmatpush1.bf16.msra.mxu0 %v603
    %757 = vmatprep.subr.bf16.mxu0 0
    %758 = vmatpush1.bf16.msra.mxu0 %v604
    %759 = vmatprep.subr.bf16.mxu0 0
    %760 = vmatpush1.bf16.msra.mxu0 %v605
    %761 = vmatprep.subr.bf16.mxu0 0
    %762 = vmatpush1.bf16.msra.mxu0 %v606
    %763 = vmatprep.subr.bf16.mxu0 0
    %764 = vmatpush1.bf16.msra.mxu0 %v607
    %765 = vmatprep.subr.bf16.mxu0 0
    %766 = vmatpush1.bf16.msra.mxu0 %v608
    %767 = vmatprep.subr.bf16.mxu0 0
    %768 = vmatpush1.bf16.msra.mxu0 %v609
    %769 = vmatprep.subr.bf16.mxu0 0
    %770 = vmatpush1.bf16.msra.mxu0 %v610
    %771 = vmatprep.mubr.bf16.mxu0 %v364
    %772 = vmatmul.mubr.bf16.gmra.mrb[0].mxu0 %v363
    %v773 = vpop.f32.mrb[0].mxu0
    %v774 = vadd.f32 %v734, %v773
    %v775 = vpop.f32.mrb[0].mxu0
    %v776 = vpop.f32.mrb[0].mxu0
    %v777 = vpop.f32.mrb[0].mxu0
    %778 = vdwg.mxu0
    %779 = vst [vmem:[#allocation9] sm:$0xff] %v774
    // Predicated region
    $region26: #{tpu_custom_call.1} parent=1 // pred_check
      _
    $region27: #{tpu_custom_call.1} parent=1 // pred_check_branch
      %781 = sbr.rel (0) target = $region29
    $region28: #{tpu_custom_call.1} parent=1 // pred_region
      %s783 = ssub.s32 128, 128
      %784 = vsyncadd [#allocation5], %s783
      %s786 = sshll.u32 [#allocation9], 4
      %s787 = int_to_ptr.vmem [resolvable:$true] %s786
      %789 = dma.vmem_to_hbm [thread:$0]  %s787, 128, %s3, [#allocation5]
    $region29: #{tpu_custom_call.1} parent=1 // pred_fallthru
      _
    // Predicated region
    $region30: #{tpu_custom_call.1} parent=1 // pred_check
      _
    $region31: #{tpu_custom_call.1} parent=1 // pred_check_branch
      %791 = sbr.rel (0) target = $region33
    $region32: #{tpu_custom_call.1} parent=1 // pred_region
      %792 = dma.done [#allocation5], 128
    $region33: #{tpu_custom_call.1} parent=1 // pred_fallthru
      _
    %793 = vsyncpa [#allocation4], 1
    %794 = vsyncpa [#allocation7], 1
    %795 = vsyncpa [#allocation5], 1

// kernel: tpu_custom_call.1
$region0: #{tpu_custom_call.1}
  #allocation0 [shape = 'u32[]', space=smem, size = 0x4, offset = 0x4, fixed_abs, tag = 'smem constant byte address 0x4 - core index']
  #allocation1 [shape = 'u32[144,128]{1,0:T(1,128)}', space=vmem, size = 0x12000, scoped, tag = 'internal scratch']
  #allocation2 [shape = 'bf16[8,768]{1,0:T(8,128)(2,1)}', space=vmem, size = 0x3000, scoped, tag = 'scratch operand']
  %s0 = inlined_call_operand.hbm [shape: f32[8,128], index: 0, kind: input, shape index: {}]
  %s1 = inlined_call_operand.hbm [shape: bf16[128,128], index: 1, kind: input, shape index: {}]
  %s2 = inlined_call_operand.hbm [shape: bf16[768,128], index: 2, kind: input, shape index: {}]
  %s3 = inlined_call_operand.hbm [shape: f32[8,128], index: 3, kind: output, shape index: {}]
  %s4 = sld [smem:[#allocation0]]
  $region34: #{tpu_custom_call.1} parent=0
    _
  %s6 = ssub.s32 1, %s4
  %s7 = scalar_select 0, %s6, %s4
  $region1: #{tpu_custom_call.1} parent=0
    #allocation3 [shape = 'u8[4096]{0}', space=vmem, size = 0x1000, scoped, tag = 'input window, operand 0, single buffered']
    #allocation4 [shape = 's32[1]{0}', space=sflag, size = 0x4, scoped, tag = 'scoped memory for tpu_custom_call.1']
    #allocation5 [shape = 's32[1]{0}', space=sflag, size = 0x4, scoped, tag = 'scoped memory for tpu_custom_call.1']
    #allocation6 [shape = 'u8[32768]{0}', space=vmem, size = 0x8000, scoped, tag = 'input window, operand 1, single buffered']
    #allocation7 [shape = 's32[1]{0}', space=sflag, size = 0x4, scoped, tag = 'scoped memory for tpu_custom_call.1']
    #allocation8 [shape = 'u8[196608]{0}', space=vmem, size = 0x30000, scoped, tag = 'input window, operand 2, single buffered']
    #allocation9 [shape = 'u8[4096]{0}', space=vmem, size = 0x1000, scoped, tag = 'output window, operand 0, single buffered']
    %8 = vsyncpa [#allocation4], 0
    %9 = vsyncpa [#allocation7], 0
    %10 = vsyncpa [#allocation5], 0
    // Predicated region
    $region2: #{tpu_custom_call.1} parent=1 // pred_check
      _
    $region3: #{tpu_custom_call.1} parent=1 // pred_check_branch
      %12 = sbr.rel (0) target = $region5
    $region4: #{tpu_custom_call.1} parent=1 // pred_region
      %s14 = ssub.s32 128, 128
      %15 = vsyncadd [#allocation4], %s14
      %s17 = sshll.u32 [#allocation3], 4
      %s18 = int_to_ptr.vmem [resolvable:$true] %s17
      %20 = dma.hbm_to_vmem [thread:$0]  %s0, 128, %s18, [#allocation4]
    $region5: #{tpu_custom_call.1} parent=1 // pred_fallthru
      _
    // Predicated region
    $region6: #{tpu_custom_call.1} parent=1 // pred_check
      _
    $region7: #{tpu_custom_call.1} parent=1 // pred_check_branch
      %22 = sbr.rel (0) target = $region9
    $region8: #{tpu_custom_call.1} parent=1 // pred_region
      %s24 = ssub.s32 1024, 1024
      %25 = vsyncadd [#allocation7], %s24
      %s26 = sshll.u32 [#allocation6], 4
      %s27 = int_to_ptr.vmem [resolvable:$true] %s26
      %32 = dma.hbm_to_vmem [thread:$0]  %s1, 1024, %s27, [#allocation7], 64, 64, 4
    $region9: #{tpu_custom_call.1} parent=1 // pred_fallthru
      _
    // Predicated region
    $region10: #{tpu_custom_call.1} parent=1 // pred_check
      _
    $region11: #{tpu_custom_call.1} parent=1 // pred_check_branch
      %34 = sbr.rel (0) target = $region13
    $region12: #{tpu_custom_call.1} parent=1 // pred_region
      %s36 = ssub.s32 6144, 6144
      %37 = vsyncadd [#allocation7], %s36
      %s38 = sshll.u32 [#allocation8], 4
      %s39 = int_to_ptr.vmem [resolvable:$true] %s38
      %44 = dma.hbm_to_vmem [thread:$0]  %s2, 6144, %s39, [#allocation7], 64, 64, 4
    $region13: #{tpu_custom_call.1} parent=1 // pred_fallthru
      _
    // Predicated region
    $region14: #{tpu_custom_call.1} parent=1 // pred_check
      _
    $region15: #{tpu_custom_call.1} parent=1 // pred_check_branch
      %46 = sbr.rel (0) target = $region17
    $region16: #{tpu_custom_call.1} parent=1 // pred_region
      %47 = dma.done [#allocation4], 128
    $region17: #{tpu_custom_call.1} parent=1 // pred_fallthru
      _
    // Predicated region
    $region18: #{tpu_custom_call.1} parent=1 // pred_check
      _
    $region19: #{tpu_custom_call.1} parent=1 // pred_check_branch
      %49 = sbr.rel (0) target = $region21
    $region20: #{tpu_custom_call.1} parent=1 // pred_region
      %50 = dma.done [#allocation7], 1024
    $region21: #{tpu_custom_call.1} parent=1 // pred_fallthru
      _
    // Predicated region
    $region22: #{tpu_custom_call.1} parent=1 // pred_check
      _
    $region23: #{tpu_custom_call.1} parent=1 // pred_check_branch
      %52 = sbr.rel (0) target = $region25
    $region24: #{tpu_custom_call.1} parent=1 // pred_region
      %53 = dma.done [#allocation7], 6144
    $region25: #{tpu_custom_call.1} parent=1 // pred_fallthru
      _
    %v56 = vld [vmem:[#allocation3] sm:$0xff]
    %v57 = vtanh.pop %v56
    %v58 = vlaneseq
    %v59 = vand.u32 %v58, 127
    %vm60 = vcmp.ge.s32.totalorder %v59, 0
    %vm61 = vcmp.lt.s32.totalorder %v59, 4
    %vm62 = vmand %vm60, %vm61
    %v63 = vsel %vm62, 1.0, 0.0
    %v64 = vmul.f32 %v57, 1.5
    %65 = vrot.lane.b32.xlu0 %v64, 4
    %v66 = vpop.permute.xlu0 %65
    %vm67 = vcmp.ge.s32.totalorder %v59, 4
    %vm68 = vcmp.lt.s32.totalorder %v59, 8
    %vm69 = vmand %vm67, %vm68
    %v70 = vsel %vm69, %v66, %v63
    %v71 = vmul.f32 %v57, 1.6666666
    %v72 = vadd.f32 %v71, 0.0
    %v73 = vmul.f32 %v72, %v64
    %v74 = vsub.f32 %v73, 0.625
    %75 = vrot.lane.b32.xlu0 %v74, 8
    %v76 = vpop.permute.xlu0 %75
    %vm77 = vcmp.ge.s32.totalorder %v59, 8
    %vm78 = vcmp.lt.s32.totalorder %v59, 12
    %vm79 = vmand %vm77, %vm78
    %v80 = vsel %vm79, %v76, %v70
    %v81 = vmul.f32 %v57, 1.75
    %v82 = vadd.f32 %v81, 0.0
    %v83 = vmul.f32 %v82, %v74
    %v84 = vmul.f32 %v64, 0.7291667
    %v85 = vsub.f32 %v83, %v84
    %86 = vrot.lane.b32.xlu0 %v85, 12
    %v87 = vpop.permute.xlu0 %86
    %vm88 = vcmp.ge.s32.totalorder %v59, 12
    %vm89 = vcmp.lt.s32.totalorder %v59, 16
    %vm90 = vmand %vm88, %vm89
    %v91 = vsel %vm90, %v87, %v80
    %v92 = vmul.f32 %v57, 1.8
    %v93 = vadd.f32 %v92, 0.0
    %v94 = vmul.f32 %v93, %v85
    %v95 = vmul.f32 %v74, 0.7875
    %v96 = vsub.f32 %v94, %v95
    %97 = vrot.lane.b32.xlu0 %v96, 16
    %v98 = vpop.permute.xlu0 %97
    %vm99 = vcmp.ge.s32.totalorder %v59, 16
    %vm100 = vcmp.lt.s32.totalorder %v59, 20
    %vm101 = vmand %vm99, %vm100
    %v102 = vsel %vm101, %v98, %v91
    %v103 = vmul.f32 %v57, 1.8333334
    %v104 = vadd.f32 %v103, 0.0
    %v105 = vmul.f32 %v104, %v96
    %v106 = vmul.f32 %v85, 0.825
    %v107 = vsub.f32 %v105, %v106
    %108 = vrot.lane.b32.xlu0 %v107, 20
    %v109 = vpop.permute.xlu0 %108
    %vm110 = vcmp.ge.s32.totalorder %v59, 20
    %vm111 = vcmp.lt.s32.totalorder %v59, 24
    %vm112 = vmand %vm110, %vm111
    %v113 = vsel %vm112, %v109, %v102
    %v114 = vpack.c.bf16 %v113, %v113
    %v115 = vld [vmem:[#allocation6] sm:$0xf]
    %v116 = vld [vmem:[#allocation6 + $0x4] sm:$0xf]
    %v117 = vld [vmem:[#allocation6 + $0x8] sm:$0xf]
    %v118 = vld [vmem:[#allocation6 + $0xc] sm:$0xf]
    %v119 = vld [vmem:[#allocation6 + $0x10] sm:$0xf]
    %v120 = vld [vmem:[#allocation6 + $0x14] sm:$0xf]
    %v121 = vld [vmem:[#allocation6 + $0x18] sm:$0xf]
    %v122 = vld [vmem:[#allocation6 + $0x1c] sm:$0xf]
    %v123 = vld [vmem:[#allocation6 + $0x20] sm:$0xf]
    %v124 = vld [vmem:[#allocation6 + $0x24] sm:$0xf]
    %v125 = vld [vmem:[#allocation6 + $0x28] sm:$0xf]
    %v126 = vld [vmem:[#allocation6 + $0x2c] sm:$0xf]
    %v127 = vld [vmem:[#allocation6 + $0x30] sm:$0xf]
    %v128 = vld [vmem:[#allocation6 + $0x34] sm:$0xf]
    %v129 = vld [vmem:[#allocation6 + $0x38] sm:$0xf]
    %v130 = vld [vmem:[#allocation6 + $0x3c] sm:$0xf]
    %v147 = vunpack.c.l.b16 %v115
    %v148 = vunpack.c.l.b16 %v116
    %v149 = vunpack.c.l.b16 %v117
    %v150 = vunpack.c.l.b16 %v118
    %v151 = vunpack.c.l.b16 %v119
    %v152 = vunpack.c.l.b16 %v120
    %v153 = vunpack.c.l.b16 %v121
    %v154 = vunpack.c.l.b16 %v122
    %v155 = vunpack.c.l.b16 %v123
    %v156 = vunpack.c.l.b16 %v124
    %v157 = vunpack.c.l.b16 %v125
    %v158 = vunpack.c.l.b16 %v126
    %v159 = vunpack.c.l.b16 %v127
    %v160 = vunpack.c.l.b16 %v128
    %v161 = vunpack.c.l.b16 %v129
    %v162 = vunpack.c.l.b16 %v130
    %v163 = vpack.c.b16 %v148, %v147
    %v164 = vpack.c.b16 %v150, %v149
    %v165 = vpack.c.b16 %v152, %v151
    %v166 = vpack.c.b16 %v154, %v153
    %v167 = vpack.c.b16 %v156, %v155
    %v168 = vpack.c.b16 %v158, %v157
    %v169 = vpack.c.b16 %v160, %v159
    %v170 = vpack.c.b16 %v162, %v161
    %179 = vmatprep.subr.bf16.mxu0 0
    %180 = vmatpush1.bf16.msra.mxu0 %v163
    %181 = vmatprep.subr.bf16.mxu0 0
    %182 = vmatpush1.bf16.msra.mxu0 %v164
    %183 = vmatprep.subr.bf16.mxu0 0
    %184 = vmatpush1.bf16.msra.mxu0 %v165
    %185 = vmatprep.subr.bf16.mxu0 0
    %186 = vmatpush1.bf16.msra.mxu0 %v166
    %187 = vmatprep.subr.bf16.mxu0 0
    %188 = vmatpush1.bf16.msra.mxu0 %v167
    %189 = vmatprep.subr.bf16.mxu0 0
    %190 = vmatpush1.bf16.msra.mxu0 %v168
    %191 = vmatprep.subr.bf16.mxu0 0
    %192 = vmatpush1.bf16.msra.mxu0 %v169
    %193 = vmatprep.subr.bf16.mxu0 0
    %194 = vmatpush1.bf16.msra.mxu0 %v170
    %195 = vmatprep.subr.bf16.mxu0 0
    %196 = vmatpush1.bf16.msra.mxu0 0
    %197 = vmatprep.subr.bf16.mxu0 0
    %198 = vmatpush1.bf16.msra.mxu0 0
    %199 = vmatprep.subr.bf16.mxu0 0
    %200 = vmatpush1.bf16.msra.mxu0 0
    %201 = vmatprep.subr.bf16.mxu0 0
    %202 = vmatpush1.bf16.msra.mxu0 0
    %203 = vmatprep.subr.bf16.mxu0 0
    %204 = vmatpush1.bf16.msra.mxu0 0
    %205 = vmatprep.subr.bf16.mxu0 0
    %206 = vmatpush1.bf16.msra.mxu0 0
    %207 = vmatprep.subr.bf16.mxu0 0
    %208 = vmatpush1.bf16.msra.mxu0 0
    %209 = vmatprep.subr.bf16.mxu0 0
    %210 = vmatpush1.bf16.msra.mxu0 0
    %211 = vmatprep.mubr.bf16.mxu0 0
    %212 = vmatmul.mubr.bf16.gmra.mrb[0].mxu0 %v114
    %v213 = vpop.f32.mrb[0].mxu0
    %v214 = vadd.f32 0.0, %v213
    %v215 = vpop.f32.mrb[0].mxu0
    %v216 = vpop.f32.mrb[0].mxu0
    %v217 = vpop.f32.mrb[0].mxu0
    %218 = vdwg.mxu0
    %v219 = vtanh.pop %v214
    %220 = vst [vmem:[#allocation2] sm:$0xf] 1065369472
    %v221 = vmul.f32 %v219, 1.5
    %v222 = vpack.c.bf16 %v221, %v221
    %223 = vst [vmem:[#allocation2 + $0x4] sm:$0xf] %v222
    %v224 = vmul.f32 %v219, 1.6666666
    %v225 = vadd.f32 %v224, 0.0
    %v226 = vmul.f32 %v225, %v221
    %v227 = vsub.f32 %v226, 0.625
    %v228 = vpack.c.bf16 %v227, %v227
    %229 = vst [vmem:[#allocation2 + $0x8] sm:$0xf] %v228
    %v230 = vmul.f32 %v219, 1.75
    %v231 = vadd.f32 %v230, 0.0
    %v232 = vmul.f32 %v231, %v227
    %v233 = vmul.f32 %v221, 0.7291667
    %v234 = vsub.f32 %v232, %v233
    %v235 = vpack.c.bf16 %v234, %v234
    %236 = vst [vmem:[#allocation2 + $0xc] sm:$0xf] %v235
    %v237 = vmul.f32 %v219, 1.8
    %v238 = vadd.f32 %v237, 0.0
    %v239 = vmul.f32 %v238, %v234
    %v240 = vmul.f32 %v227, 0.7875
    %v241 = vsub.f32 %v239, %v240
    %v242 = vpack.c.bf16 %v241, %v241
    %243 = vst [vmem:[#allocation2 + $0x10] sm:$0xf] %v242
    %v244 = vmul.f32 %v219, 1.8333334
    %v245 = vadd.f32 %v244, 0.0
    %v246 = vmul.f32 %v245, %v241
    %v247 = vmul.f32 %v234, 0.825
    %v248 = vsub.f32 %v246, %v247
    %v249 = vpack.c.bf16 %v248, %v248
    %250 = vst [vmem:[#allocation2 + $0x14] sm:$0xf] %v249
    %v251 = vld [vmem:[#allocation2] sm:$0xff]
    %v252 = vld [vmem:[#allocation2 + $0x8] sm:$0xff]
    %v253 = vld [vmem:[#allocation2 + $0x10] sm:$0xff]
    %v254 = vld [vmem:[#allocation8] sm:$0xf]
    %v255 = vld [vmem:[#allocation8 + $0x4] sm:$0xf]
    %v256 = vld [vmem:[#allocation8 + $0x8] sm:$0xf]
    %v257 = vld [vmem:[#allocation8 + $0xc] sm:$0xf]
    %v258 = vld [vmem:[#allocation8 + $0x10] sm:$0xf]
    %v259 = vld [vmem:[#allocation8 + $0x14] sm:$0xf]
    %v260 = vld [vmem:[#allocation8 + $0x18] sm:$0xf]
    %v261 = vld [vmem:[#allocation8 + $0x1c] sm:$0xf]
    %v262 = vld [vmem:[#allocation8 + $0x20] sm:$0xf]
    %v263 = vld [vmem:[#allocation8 + $0x24] sm:$0xf]
    %v264 = vld [vmem:[#allocation8 + $0x28] sm:$0xf]
    %v265 = vld [vmem:[#allocation8 + $0x2c] sm:$0xf]
    %v266 = vld [vmem:[#allocation8 + $0x30] sm:$0xf]
    %v267 = vld [vmem:[#allocation8 + $0x34] sm:$0xf]
    %v268 = vld [vmem:[#allocation8 + $0x38] sm:$0xf]
    %v269 = vld [vmem:[#allocation8 + $0x3c] sm:$0xf]
    %v270 = vld [vmem:[#allocation8 + $0x40] sm:$0xf]
    %v271 = vld [vmem:[#allocation8 + $0x44] sm:$0xf]
    %v272 = vld [vmem:[#allocation8 + $0x48] sm:$0xf]
    %v273 = vld [vmem:[#allocation8 + $0x4c] sm:$0xf]
    %v274 = vld [vmem:[#allocation8 + $0x50] sm:$0xf]
    %v275 = vld [vmem:[#allocation8 + $0x54] sm:$0xf]
    %v276 = vld [vmem:[#allocation8 + $0x58] sm:$0xf]
    %v277 = vld [vmem:[#allocation8 + $0x5c] sm:$0xf]
    %v278 = vld [vmem:[#allocation8 + $0x60] sm:$0xf]
    %v279 = vld [vmem:[#allocation8 + $0x64] sm:$0xf]
    %v280 = vld [vmem:[#allocation8 + $0x68] sm:$0xf]
    %v281 = vld [vmem:[#allocation8 + $0x6c] sm:$0xf]
    %v282 = vld [vmem:[#allocation8 + $0x70] sm:$0xf]
    %v283 = vld [vmem:[#allocation8 + $0x74] sm:$0xf]
    %v284 = vld [vmem:[#allocation8 + $0x78] sm:$0xf]
    %v285 = vld [vmem:[#allocation8 + $0x7c] sm:$0xf]
    %v286 = vld [vmem:[#allocation8 + $0x80] sm:$0xf]
    %v287 = vld [vmem:[#allocation8 + $0x84] sm:$0xf]
    %v288 = vld [vmem:[#allocation8 + $0x88] sm:$0xf]
    %v289 = vld [vmem:[#allocation8 + $0x8c] sm:$0xf]
    %v290 = vld [vmem:[#allocation8 + $0x90] sm:$0xf]
    %v291 = vld [vmem:[#allocation8 + $0x94] sm:$0xf]
    %v292 = vld [vmem:[#allocation8 + $0x98] sm:$0xf]
    %v293 = vld [vmem:[#allocation8 + $0x9c] sm:$0xf]
    %v294 = vld [vmem:[#allocation8 + $0xa0] sm:$0xf]
    %v295 = vld [vmem:[#allocation8 + $0xa4] sm:$0xf]
    %v296 = vld [vmem:[#allocation8 + $0xa8] sm:$0xf]
    %v297 = vld [vmem:[#allocation8 + $0xac] sm:$0xf]
    %v298 = vld [vmem:[#allocation8 + $0xb0] sm:$0xf]
    %v299 = vld [vmem:[#allocation8 + $0xb4] sm:$0xf]
    %v300 = vld [vmem:[#allocation8 + $0xb8] sm:$0xf]
    %v301 = vld [vmem:[#allocation8 + $0xbc] sm:$0xf]
    %v302 = vld [vmem:[#allocation8 + $0xc0] sm:$0xf]
    %v303 = vld [vmem:[#allocation8 + $0xc4] sm:$0xf]
    %v304 = vld [vmem:[#allocation8 + $0xc8] sm:$0xf]
    %v305 = vld [vmem:[#allocation8 + $0xcc] sm:$0xf]
    %v306 = vld [vmem:[#allocation8 + $0xd0] sm:$0xf]
    %v307 = vld [vmem:[#allocation8 + $0xd4] sm:$0xf]
    %v308 = vld [vmem:[#allocation8 + $0xd8] sm:$0xf]
    %v309 = vld [vmem:[#allocation8 + $0xdc] sm:$0xf]
    %v310 = vld [vmem:[#allocation8 + $0xe0] sm:$0xf]
    %v311 = vld [vmem:[#allocation8 + $0xe4] sm:$0xf]
    %v312 = vld [vmem:[#allocation8 + $0xe8] sm:$0xf]
    %v313 = vld [vmem:[#allocation8 + $0xec] sm:$0xf]
    %v314 = vld [vmem:[#allocation8 + $0xf0] sm:$0xf]
    %v315 = vld [vmem:[#allocation8 + $0xf4] sm:$0xf]
    %v316 = vld [vmem:[#allocation8 + $0xf8] sm:$0xf]
    %v317 = vld [vmem:[#allocation8 + $0xfc] sm:$0xf]
    %v318 = vld [vmem:[#allocation8 + $0x100] sm:$0xf]
    %v319 = vld [vmem:[#allocation8 + $0x104] sm:$0xf]
    %v320 = vld [vmem:[#allocation8 + $0x108] sm:$0xf]
    %v321 = vld [vmem:[#allocation8 + $0x10c] sm:$0xf]
    %v322 = vld [vmem:[#allocation8 + $0x110] sm:$0xf]
    %v323 = vld [vmem:[#allocation8 + $0x114] sm:$0xf]
    %v324 = vld [vmem:[#allocation8 + $0x118] sm:$0xf]
    %v325 = vld [vmem:[#allocation8 + $0x11c] sm:$0xf]
    %v326 = vld [vmem:[#allocation8 + $0x120] sm:$0xf]
    %v327 = vld [vmem:[#allocation8 + $0x124] sm:$0xf]
    %v328 = vld [vmem:[#allocation8 + $0x128] sm:$0xf]
    %v329 = vld [vmem:[#allocation8 + $0x12c] sm:$0xf]
    %v330 = vld [vmem:[#allocation8 + $0x130] sm:$0xf]
    %v331 = vld [vmem:[#allocation8 + $0x134] sm:$0xf]
    %v332 = vld [vmem:[#allocation8 + $0x138] sm:$0xf]
    %v333 = vld [vmem:[#allocation8 + $0x13c] sm:$0xf]
    %v334 = vld [vmem:[#allocation8 + $0x140] sm:$0xf]
    %v335 = vld [vmem:[#allocation8 + $0x144] sm:$0xf]
    %v336 = vld [vmem:[#allocation8 + $0x148] sm:$0xf]
    %v337 = vld [vmem:[#allocation8 + $0x14c] sm:$0xf]
    %v338 = vld [vmem:[#allocation8 + $0x150] sm:$0xf]
    %v339 = vld [vmem:[#allocation8 + $0x154] sm:$0xf]
    %v340 = vld [vmem:[#allocation8 + $0x158] sm:$0xf]
    %v341 = vld [vmem:[#allocation8 + $0x15c] sm:$0xf]
    %v342 = vld [vmem:[#allocation8 + $0x160] sm:$0xf]
    %v343 = vld [vmem:[#allocation8 + $0x164] sm:$0xf]
    %v344 = vld [vmem:[#allocation8 + $0x168] sm:$0xf]
    %v345 = vld [vmem:[#allocation8 + $0x16c] sm:$0xf]
    %v346 = vld [vmem:[#allocation8 + $0x170] sm:$0xf]
    %v347 = vld [vmem:[#allocation8 + $0x174] sm:$0xf]
    %v348 = vld [vmem:[#allocation8 + $0x178] sm:$0xf]
    %v349 = vld [vmem:[#allocation8 + $0x17c] sm:$0xf]
    %v353 = vunpack.c.l.b16 %v251
    %v354 = vunpack.c.h.b16 %v251
    %v355 = vunpack.c.l.b16 %v252
    %v356 = vunpack.c.h.b16 %v252
    %v357 = vunpack.c.l.b16 %v253
    %v358 = vunpack.c.h.b16 %v253
    %v359 = vpack.c.b16 %v353, %v353
    %v360 = vpack.c.b16 %v354, %v354
    %v361 = vpack.c.b16 %v355, %v355
    %v362 = vpack.c.b16 %v356, %v356
    %v363 = vpack.c.b16 %v357, %v357
    %v364 = vpack.c.b16 %v358, %v358
    %v467 = vunpack.c.l.b16 %v254
    %v468 = vunpack.c.l.b16 %v255
    %v469 = vunpack.c.l.b16 %v256
    %v470 = vunpack.c.l.b16 %v257
    %v471 = vunpack.c.l.b16 %v258
    %v472 = vunpack.c.l.b16 %v259
    %v473 = vunpack.c.l.b16 %v260
    %v474 = vunpack.c.l.b16 %v261
    %v475 = vunpack.c.l.b16 %v262
    %v476 = vunpack.c.l.b16 %v263
    %v477 = vunpack.c.l.b16 %v264
    %v478 = vunpack.c.l.b16 %v265
    %v479 = vunpack.c.l.b16 %v266
    %v480 = vunpack.c.l.b16 %v267
    %v481 = vunpack.c.l.b16 %v268
    %v482 = vunpack.c.l.b16 %v269
    %v483 = vunpack.c.l.b16 %v270
    %v484 = vunpack.c.l.b16 %v271
    %v485 = vunpack.c.l.b16 %v272
    %v486 = vunpack.c.l.b16 %v273
    %v487 = vunpack.c.l.b16 %v274
    %v488 = vunpack.c.l.b16 %v275
    %v489 = vunpack.c.l.b16 %v276
    %v490 = vunpack.c.l.b16 %v277
    %v491 = vunpack.c.l.b16 %v278
    %v492 = vunpack.c.l.b16 %v279
    %v493 = vunpack.c.l.b16 %v280
    %v494 = vunpack.c.l.b16 %v281
    %v495 = vunpack.c.l.b16 %v282
    %v496 = vunpack.c.l.b16 %v283
    %v497 = vunpack.c.l.b16 %v284
    %v498 = vunpack.c.l.b16 %v285
    %v499 = vunpack.c.l.b16 %v286
    %v500 = vunpack.c.l.b16 %v287
    %v501 = vunpack.c.l.b16 %v288
    %v502 = vunpack.c.l.b16 %v289
    %v503 = vunpack.c.l.b16 %v290
    %v504 = vunpack.c.l.b16 %v291
    %v505 = vunpack.c.l.b16 %v292
    %v506 = vunpack.c.l.b16 %v293
    %v507 = vunpack.c.l.b16 %v294
    %v508 = vunpack.c.l.b16 %v295
    %v509 = vunpack.c.l.b16 %v296
    %v510 = vunpack.c.l.b16 %v297
    %v511 = vunpack.c.l.b16 %v298
    %v512 = vunpack.c.l.b16 %v299
    %v513 = vunpack.c.l.b16 %v300
    %v514 = vunpack.c.l.b16 %v301
    %v515 = vunpack.c.l.b16 %v302
    %v516 = vunpack.c.l.b16 %v303
    %v517 = vunpack.c.l.b16 %v304
    %v518 = vunpack.c.l.b16 %v305
    %v519 = vunpack.c.l.b16 %v306
    %v520 = vunpack.c.l.b16 %v307
    %v521 = vunpack.c.l.b16 %v308
    %v522 = vunpack.c.l.b16 %v309
    %v523 = vunpack.c.l.b16 %v310
    %v524 = vunpack.c.l.b16 %v311
    %v525 = vunpack.c.l.b16 %v312
    %v526 = vunpack.c.l.b16 %v313
    %v527 = vunpack.c.l.b16 %v314
    %v528 = vunpack.c.l.b16 %v315
    %v529 = vunpack.c.l.b16 %v316
    %v530 = vunpack.c.l.b16 %v317
    %v531 = vunpack.c.l.b16 %v318
    %v532 = vunpack.c.l.b16 %v319
    %v533 = vunpack.c.l.b16 %v320
    %v534 = vunpack.c.l.b16 %v321
    %v535 = vunpack.c.l.b16 %v322
    %v536 = vunpack.c.l.b16 %v323
    %v537 = vunpack.c.l.b16 %v324
    %v538 = vunpack.c.l.b16 %v325
    %v539 = vunpack.c.l.b16 %v326
    %v540 = vunpack.c.l.b16 %v327
    %v541 = vunpack.c.l.b16 %v328
    %v542 = vunpack.c.l.b16 %v329
    %v543 = vunpack.c.l.b16 %v330
    %v544 = vunpack.c.l.b16 %v331
    %v545 = vunpack.c.l.b16 %v332
    %v546 = vunpack.c.l.b16 %v333
    %v547 = vunpack.c.l.b16 %v334
    %v548 = vunpack.c.l.b16 %v335
    %v549 = vunpack.c.l.b16 %v336
    %v550 = vunpack.c.l.b16 %v337
    %v551 = vunpack.c.l.b16 %v338
    %v552 = vunpack.c.l.b16 %v339
    %v553 = vunpack.c.l.b16 %v340
    %v554 = vunpack.c.l.b16 %v341
    %v555 = vunpack.c.l.b16 %v342
    %v556 = vunpack.c.l.b16 %v343
    %v557 = vunpack.c.l.b16 %v344
    %v558 = vunpack.c.l.b16 %v345
    %v559 = vunpack.c.l.b16 %v346
    %v560 = vunpack.c.l.b16 %v347
    %v561 = vunpack.c.l.b16 %v348
    %v562 = vunpack.c.l.b16 %v349
    %v563 = vpack.c.b16 %v468, %v467
    %v564 = vpack.c.b16 %v470, %v469
    %v565 = vpack.c.b16 %v472, %v471
    %v566 = vpack.c.b16 %v474, %v473
    %v567 = vpack.c.b16 %v476, %v475
    %v568 = vpack.c.b16 %v478, %v477
    %v569 = vpack.c.b16 %v480, %v479
    %v570 = vpack.c.b16 %v482, %v481
    %v571 = vpack.c.b16 %v484, %v483
    %v572 = vpack.c.b16 %v486, %v485
    %v573 = vpack.c.b16 %v488, %v487
    %v574 = vpack.c.b16 %v490, %v489
    %v575 = vpack.c.b16 %v492, %v491
    %v576 = vpack.c.b16 %v494, %v493
    %v577 = vpack.c.b16 %v496, %v495
    %v578 = vpack.c.b16 %v498, %v497
    %v579 = vpack.c.b16 %v500, %v499
    %v580 = vpack.c.b16 %v502, %v501
    %v581 = vpack.c.b16 %v504, %v503
    %v582 = vpack.c.b16 %v506, %v505
    %v583 = vpack.c.b16 %v508, %v507
    %v584 = vpack.c.b16 %v510, %v509
    %v585 = vpack.c.b16 %v512, %v511
    %v586 = vpack.c.b16 %v514, %v513
    %v587 = vpack.c.b16 %v516, %v515
    %v588 = vpack.c.b16 %v518, %v517
    %v589 = vpack.c.b16 %v520, %v519
    %v590 = vpack.c.b16 %v522, %v521
    %v591 = vpack.c.b16 %v524, %v523
    %v592 = vpack.c.b16 %v526, %v525
    %v593 = vpack.c.b16 %v528, %v527
    %v594 = vpack.c.b16 %v530, %v529
    %v595 = vpack.c.b16 %v532, %v531
    %v596 = vpack.c.b16 %v534, %v533
    %v597 = vpack.c.b16 %v536, %v535
    %v598 = vpack.c.b16 %v538, %v537
    %v599 = vpack.c.b16 %v540, %v539
    %v600 = vpack.c.b16 %v542, %v541
    %v601 = vpack.c.b16 %v544, %v543
    %v602 = vpack.c.b16 %v546, %v545
    %v603 = vpack.c.b16 %v548, %v547
    %v604 = vpack.c.b16 %v550, %v549
    %v605 = vpack.c.b16 %v552, %v551
    %v606 = vpack.c.b16 %v554, %v553
    %v607 = vpack.c.b16 %v556, %v555
    %v608 = vpack.c.b16 %v558, %v557
    %v609 = vpack.c.b16 %v560, %v559
    %v610 = vpack.c.b16 %v562, %v561
    %659 = vmatprep.subr.bf16.mxu0 0
    %660 = vmatpush1.bf16.msra.mxu0 %v563
    %661 = vmatprep.subr.bf16.mxu0 0
    %662 = vmatpush1.bf16.msra.mxu0 %v564
    %663 = vmatprep.subr.bf16.mxu0 0
    %664 = vmatpush1.bf16.msra.mxu0 %v565
    %665 = vmatprep.subr.bf16.mxu0 0
    %666 = vmatpush1.bf16.msra.mxu0 %v566
    %667 = vmatprep.subr.bf16.mxu0 0
    %668 = vmatpush1.bf16.msra.mxu0 %v567
    %669 = vmatprep.subr.bf16.mxu0 0
    %670 = vmatpush1.bf16.msra.mxu0 %v568
    %671 = vmatprep.subr.bf16.mxu0 0
    %672 = vmatpush1.bf16.msra.mxu0 %v569
    %673 = vmatprep.subr.bf16.mxu0 0
    %674 = vmatpush1.bf16.msra.mxu0 %v570
    %675 = vmatprep.subr.bf16.mxu0 0
    %676 = vmatpush1.bf16.msra.mxu0 %v571
    %677 = vmatprep.subr.bf16.mxu0 0
    %678 = vmatpush1.bf16.msra.mxu0 %v572
    %679 = vmatprep.subr.bf16.mxu0 0
    %680 = vmatpush1.bf16.msra.mxu0 %v573
    %681 = vmatprep.subr.bf16.mxu0 0
    %682 = vmatpush1.bf16.msra.mxu0 %v574
    %683 = vmatprep.subr.bf16.mxu0 0
    %684 = vmatpush1.bf16.msra.mxu0 %v575
    %685 = vmatprep.subr.bf16.mxu0 0
    %686 = vmatpush1.bf16.msra.mxu0 %v576
    %687 = vmatprep.subr.bf16.mxu0 0
    %688 = vmatpush1.bf16.msra.mxu0 %v577
    %689 = vmatprep.subr.bf16.mxu0 0
    %690 = vmatpush1.bf16.msra.mxu0 %v578
    %691 = vmatprep.mubr.bf16.mxu0 %v360
    %692 = vmatmul.mubr.bf16.gmra.mrb[0].mxu0 %v359
    %v693 = vpop.f32.mrb[0].mxu0
    %v694 = vadd.f32 0.0, %v693
    %v695 = vpop.f32.mrb[0].mxu0
    %v696 = vpop.f32.mrb[0].mxu0
    %v697 = vpop.f32.mrb[0].mxu0
    %698 = vdwg.mxu0
    %699 = vmatprep.subr.bf16.mxu0 0
    %700 = vmatpush1.bf16.msra.mxu0 %v579
    %701 = vmatprep.subr.bf16.mxu0 0
    %702 = vmatpush1.bf16.msra.mxu0 %v580
    %703 = vmatprep.subr.bf16.mxu0 0
    %704 = vmatpush1.bf16.msra.mxu0 %v581
    %705 = vmatprep.subr.bf16.mxu0 0
    %706 = vmatpush1.bf16.msra.mxu0 %v582
    %707 = vmatprep.subr.bf16.mxu0 0
    %708 = vmatpush1.bf16.msra.mxu0 %v583
    %709 = vmatprep.subr.bf16.mxu0 0
    %710 = vmatpush1.bf16.msra.mxu0 %v584
    %711 = vmatprep.subr.bf16.mxu0 0
    %712 = vmatpush1.bf16.msra.mxu0 %v585
    %713 = vmatprep.subr.bf16.mxu0 0
    %714 = vmatpush1.bf16.msra.mxu0 %v586
    %715 = vmatprep.subr.bf16.mxu0 0
    %716 = vmatpush1.bf16.msra.mxu0 %v587
    %717 = vmatprep.subr.bf16.mxu0 0
    %718 = vmatpush1.bf16.msra.mxu0 %v588
    %719 = vmatprep.subr.bf16.mxu0 0
    %720 = vmatpush1.bf16.msra.mxu0 %v589
    %721 = vmatprep.subr.bf16.mxu0 0
    %722 = vmatpush1.bf16.msra.mxu0 %v590
    %723 = vmatprep.subr.bf16.mxu0 0
    %724 = vmatpush1.bf16.msra.mxu0 %v591
    %725 = vmatprep.subr.bf16.mxu0 0
    %726 = vmatpush1.bf16.msra.mxu0 %v592
    %727 = vmatprep.subr.bf16.mxu0 0
    %728 = vmatpush1.bf16.msra.mxu0 %v593
    %729 = vmatprep.subr.bf16.mxu0 0
    %730 = vmatpush1.bf16.msra.mxu0 %v594
    %731 = vmatprep.mubr.bf16.mxu0 %v362
    %732 = vmatmul.mubr.bf16.gmra.mrb[0].mxu0 %v361
    %v733 = vpop.f32.mrb[0].mxu0
    %v734 = vadd.f32 %v694, %v733
    %v735 = vpop.f32.mrb[0].mxu0
    %v736 = vpop.f32.mrb[0].mxu0
    %v737 = vpop.f32.mrb[0].mxu0
    %738 = vdwg.mxu0
    %739 = vmatprep.subr.bf16.mxu0 0
    %740 = vmatpush1.bf16.msra.mxu0 %v595
    %741 = vmatprep.subr.bf16.mxu0 0
    %742 = vmatpush1.bf16.msra.mxu0 %v596
    %743 = vmatprep.subr.bf16.mxu0 0
    %744 = vmatpush1.bf16.msra.mxu0 %v597
    %745 = vmatprep.subr.bf16.mxu0 0
    %746 = vmatpush1.bf16.msra.mxu0 %v598
    %747 = vmatprep.subr.bf16.mxu0 0
    %748 = vmatpush1.bf16.msra.mxu0 %v599
    %749 = vmatprep.subr.bf16.mxu0 0
    %750 = vmatpush1.bf16.msra.mxu0 %v600
    %751 = vmatprep.subr.bf16.mxu0 0
    %752 = vmatpush1.bf16.msra.mxu0 %v601
    %753 = vmatprep.subr.bf16.mxu0 0
    %754 = vmatpush1.bf16.msra.mxu0 %v602
    %755 = vmatprep.subr.bf16.mxu0 0
    %756 = vmatpush1.bf16.msra.mxu0 %v603
    %757 = vmatprep.subr.bf16.mxu0 0
    %758 = vmatpush1.bf16.msra.mxu0 %v604
    %759 = vmatprep.subr.bf16.mxu0 0
    %760 = vmatpush1.bf16.msra.mxu0 %v605
    %761 = vmatprep.subr.bf16.mxu0 0
    %762 = vmatpush1.bf16.msra.mxu0 %v606
    %763 = vmatprep.subr.bf16.mxu0 0
    %764 = vmatpush1.bf16.msra.mxu0 %v607
    %765 = vmatprep.subr.bf16.mxu0 0
    %766 = vmatpush1.bf16.msra.mxu0 %v608
    %767 = vmatprep.subr.bf16.mxu0 0
    %768 = vmatpush1.bf16.msra.mxu0 %v609
    %769 = vmatprep.subr.bf16.mxu0 0
    %770 = vmatpush1.bf16.msra.mxu0 %v610
    %771 = vmatprep.mubr.bf16.mxu0 %v364
    %772 = vmatmul.mubr.bf16.gmra.mrb[0].mxu0 %v363
    %v773 = vpop.f32.mrb[0].mxu0
    %v774 = vadd.f32 %v734, %v773
    %v775 = vpop.f32.mrb[0].mxu0
    %v776 = vpop.f32.mrb[0].mxu0
    %v777 = vpop.f32.mrb[0].mxu0
    %778 = vdwg.mxu0
    %779 = vst [vmem:[#allocation9] sm:$0xff] %v774
    // Predicated region
    $region26: #{tpu_custom_call.1} parent=1 // pred_check
      _
    $region27: #{tpu_custom_call.1} parent=1 // pred_check_branch
      %781 = sbr.rel (0) target = $region29
    $region28: #{tpu_custom_call.1} parent=1 // pred_region
      %s783 = ssub.s32 128, 128
      %784 = vsyncadd [#allocation5], %s783
      %s786 = sshll.u32 [#allocation9], 4
      %s787 = int_to_ptr.vmem [resolvable:$true] %s786
      %789 = dma.vmem_to_hbm [thread:$0]  %s787, 128, %s3, [#allocation5]
    $region29: #{tpu_custom_call.1} parent=1 // pred_fallthru
      _
    // Predicated region
    $region30: #{tpu_custom_call.1} parent=1 // pred_check
      _
    $region31: #{tpu_custom_call.1} parent=1 // pred_check_branch
      %791 = sbr.rel (0) target = $region33
    $region32: #{tpu_custom_call.1} parent=1 // pred_region
      %792 = dma.done [#allocation5], 128
    $region33: #{tpu_custom_call.1} parent=1 // pred_fallthru
      _
    %793 = vsyncpa [#allocation4], 1
    %794 = vsyncpa [#allocation7], 1
    %795 = vsyncpa [#allocation5], 1

</llo_original>
